<compile_context>
chip_gen: v7x
topology: tpu7x:2x2x1
jax: 0.10.0
libtpu: 0.0.40
codegen_flags: <defaults>
</compile_context>

<pallas_src>
import jax
import jax.numpy as jnp
from jax.experimental import pallas as pl
from jax.experimental.pallas import tpu as pltpu

# --- model dimensions (ValueNetwork defaults used in crowd_nav) ---
B = 16                # demo batch
N_HUMANS = 5
SELF_DIM = 6          # self_state_dim
HUMAN_DIM = 7         # input_dim - self_state_dim
INPUT_DIM = SELF_DIM + HUMAN_DIM
WR_DIMS = (64, 32)    # w_r mlp dims (last == X_dim)
WH_DIMS = (64, 32)    # w_h mlp dims (last == X_dim)
X_DIM = 32
GCN_HID = 52          # gcn2_w1_dim is hard-coded to 52 in ValueNetwork.__init__
FINAL_DIM = 32        # final_state_dim
PLANNING_DIMS = (64, 1)
N_AGENTS = N_HUMANS + 1
OUT_DIM = PLANNING_DIMS[-1]

# --- kernel tiling / packing constants ---
FEAT = 8              # self (6) / human (7) features zero-padded to 8 input lanes
CW = 64               # all activations / weight columns zero-padded to 64 lanes
KW = 64               # padded weight rows (every layer fan-in <= 64)
TB_MAX = 128          # samples per grid step cap: (1+H)*128 = 768 rows per step,
                      # a multiple of 256 (v6e/v7x) and 128 (v5e); activations at
                      # this tile are ~a few hundred KiB, well under VMEM limits.

# slot indices inside the packed slabs
(W_R0, W_R1, W_H0, W_H1,
 W_G1R, W_G1S, W_G2R, W_G2S,
 W_V0, W_V1) = range(10)
NW = 10
(B_R0, B_R1, B_H0, B_H1, B_G1, B_G2, B_V0, B_V1) = range(8)
NB = 8


def _round_up(x, m):
    return (x + m - 1) // m * m


def _make_kernel(tb):
    """Kernel for a batch tile of `tb` samples (node-major, (1+H)*tb rows)."""
    m = N_AGENTS * tb

    def kernel(x_ref, w_ref, b_ref, out_ref, x_sc):
        f32 = jnp.float32

        def dense(x, wi, bi=None, relu=True):
            # Padded weight rows beyond the true fan-in and padded activation
            # lanes are all exactly zero, so no activation slicing is needed.
            k = x.shape[-1]
            y = jnp.dot(x, w_ref[wi, 0:k, :], preferred_element_type=f32)
            if bi is not None:
                y = y + b_ref[bi:bi + 1, :]
            return jnp.maximum(y, 0.0) if relu else y

        # --- w_r / w_h embedding mlps (both built with last_relu=True) ---
        r = dense(dense(x_ref[0:tb, :], W_R0, B_R0), W_R1, B_R1)     # [tb, 64]
        h = dense(dense(x_ref[tb:m, :], W_H0, B_H0), W_H1, B_H1)     # [H*tb, 64]

        # node-major X assembled in a VMEM scratch (adjacent row ranges; robot is
        # node 0, matching torch.cat([self_emb.unsqueeze(1), human_emb], dim=1)).
        x_sc[0:tb, :] = r
        x_sc[tb:m, :] = h
        X = x_sc[...]                                                # [(1+H)*tb, 64]

        def graph_conv(x, rel_i, root_i, bi):
            # PyG GraphConv (aggr='add') on the fully-connected no-self-loop graph:
            #   out_i = lin_rel(sum_{j != i} x_j) + lin_root(x_i)
            # neighbor sum == (sum over all nodes) - x_i -> 3-D broadcast subtract.
            x3 = x.reshape(N_AGENTS, tb, CW)
            agg = (jnp.sum(x3, axis=0, keepdims=True) - x3).reshape(m, CW)
            y = (jnp.dot(agg, w_ref[rel_i], preferred_element_type=f32)
                 + jnp.dot(x, w_ref[root_i], preferred_element_type=f32)
                 + b_ref[bi:bi + 1, :])
            return jnp.maximum(y, 0.0)        # Graphgnn applies ReLU after both convs

        h1 = graph_conv(X, W_G1R, W_G1S, B_G1)                       # GCN_HID real cols
        h2 = graph_conv(h1, W_G2R, W_G2S, B_G2)                      # FINAL_DIM real cols

        # --- value head on the robot node: Linear+ReLU, Linear (no final ReLU) ---
        v = dense(h2[0:tb, :], W_V0, B_V0)                           # [tb, 64]
        out_ref[...] = dense(v, W_V1, B_V1, relu=False)              # [tb, 64]; col 0 real

    return kernel


def make_params(key):
    """Deterministic synthetic parameters (PyTorch-Linear-style uniform init).
    Weights stored [in, out] (transposed vs torch.nn.Linear), biases [1, out]."""
    def linear(k, fan_in, fan_out, bias=True):
        kw, kb = jax.random.split(k)
        bound = 1.0 / (fan_in ** 0.5)
        w = jax.random.uniform(kw, (fan_in, fan_out), jnp.float32, -bound, bound)
        if bias:
            b = jax.random.uniform(kb, (1, fan_out), jnp.float32, -bound, bound)
            return (w, b)
        return (w,)

    ks = jax.random.split(key, 10)
    params = []
    params += linear(ks[0], SELF_DIM, WR_DIMS[0])                # w_r layer 0
    params += linear(ks[1], WR_DIMS[0], WR_DIMS[1])              # w_r layer 1
    params += linear(ks[2], HUMAN_DIM, WH_DIMS[0])               # w_h layer 0
    params += linear(ks[3], WH_DIMS[0], WH_DIMS[1])              # w_h layer 1
    params += linear(ks[4], X_DIM, GCN_HID)                      # conv1 lin_rel (w, b)
    params += linear(ks[5], X_DIM, GCN_HID, bias=False)          # conv1 lin_root
    params += linear(ks[6], GCN_HID, FINAL_DIM)                  # conv2 lin_rel (w, b)
    params += linear(ks[7], GCN_HID, FINAL_DIM, bias=False)      # conv2 lin_root
    params += linear(ks[8], FINAL_DIM, PLANNING_DIMS[0])         # value_net layer 0
    params += linear(ks[9], PLANNING_DIMS[0], PLANNING_DIMS[1])  # value_net layer 1
    return tuple(params)


def pack_params(raw):
    """Pack the 18 raw parameter arrays into one weight slab and one bias slab.
    All padding is exactly zero (the kernel relies on this invariant)."""
    (wr0, br0, wr1, br1, wh0, bh0, wh1, bh1,
     g1_rel_w, g1_rel_b, g1_root_w,
     g2_rel_w, g2_rel_b, g2_root_w,
     v0_w, v0_b, v1_w, v1_b) = raw

    def pad_w(w):
        z = jnp.zeros((KW, CW), jnp.float32)
        return z.at[:w.shape[0], :w.shape[1]].set(w)

    def pad_b(b):
        z = jnp.zeros((CW,), jnp.float32)
        return z.at[:b.shape[1]].set(b[0])

    w_slab = jnp.stack([pad_w(wr0), pad_w(wr1), pad_w(wh0), pad_w(wh1),
                        pad_w(g1_rel_w), pad_w(g1_root_w),
                        pad_w(g2_rel_w), pad_w(g2_root_w),
                        pad_w(v0_w), pad_w(v1_w)], axis=0)             # [10, 64, 64]
    b_slab = jnp.stack([pad_b(br0), pad_b(br1), pad_b(bh0), pad_b(bh1),
                        pad_b(g1_rel_b), pad_b(g2_rel_b),
                        pad_b(v0_b), pad_b(v1_b)], axis=0)             # [8, 64]
    return w_slab, b_slab


@jax.jit
def value_network_forward(state, w_slab, b_slab):
    bsz = state.shape[0]
    # Collapse the grid to a single step for small batches; tile at TB_MAX beyond.
    tb = min(_round_up(bsz, 8), TB_MAX)
    bp = _round_up(bsz, tb)
    n_tiles = bp // tb
    if bp != bsz:
        state = jnp.pad(state, ((0, bp - bsz), (0, 0), (0, 0)))

    # XLA-side layout plumbing: ONE node-major slab per batch tile.
    # Rows [0:tb) = robot (self state, 6->8 lanes); rows [tb*(1+n) ...] = human n (7->8).
    self_f = jnp.pad(state[:, 0, :SELF_DIM],
                     ((0, 0), (0, FEAT - SELF_DIM)))                     # [bp, 8]
    human_f = jnp.pad(state[:, :, SELF_DIM:],
                      ((0, 0), (0, 0), (0, FEAT - HUMAN_DIM)))           # [bp, H, 8]
    nodes = jnp.concatenate([self_f[:, None, :], human_f], axis=1)       # [bp, A, 8]
    slab = (nodes.reshape(n_tiles, tb, N_AGENTS, FEAT)
                 .transpose(0, 2, 1, 3)
                 .reshape(n_tiles, N_AGENTS * tb, FEAT))                 # [tiles, A*tb, 8]

    out = pl.pallas_call(
        _make_kernel(tb),
        out_shape=jax.ShapeDtypeStruct((bp, CW), jnp.float32),           # lane-dense output
        grid=(n_tiles,),
        in_specs=[
            pl.BlockSpec((None, N_AGENTS * tb, FEAT), lambda t: (t, 0, 0)),
            pl.BlockSpec((NW, KW, CW), lambda t: (0, 0, 0)),   # constant -> fetched once
            pl.BlockSpec((NB, CW), lambda t: (0, 0)),          # constant -> fetched once
        ],
        out_specs=pl.BlockSpec((tb, CW), lambda t: (t, 0)),
        scratch_shapes=[pltpu.VMEM((N_AGENTS * tb, CW), jnp.float32)],   # node-major X
        compiler_params=pltpu.CompilerParams(
            dimension_semantics=("parallel",)),   # batch tiles shard across TCs when >1
    )(slab, w_slab, b_slab)
    return out[:bsz, :OUT_DIM]


def reference_forward(state, raw):
    """Plain-JAX reference of ValueNetwork.forward (for verification)."""
    hp = jax.lax.Precision.HIGHEST
    (wr0, br0, wr1, br1, wh0, bh0, wh1, bh1,
     g1_rel_w, g1_rel_b, g1_root_w,
     g2_rel_w, g2_rel_b, g2_root_w,
     v0_w, v0_b, v1_w, v1_b) = raw

    self_state = state[:, 0, :SELF_DIM]
    human = state[:, :, SELF_DIM:]
    r = jax.nn.relu(jnp.dot(self_state, wr0, precision=hp) + br0)
    r = jax.nn.relu(jnp.dot(r, wr1, precision=hp) + br1)            # [B, X]
    h = jax.nn.relu(jnp.dot(human, wh0, precision=hp) + bh0)
    h = jax.nn.relu(jnp.dot(h, wh1, precision=hp) + bh1)            # [B, H, X]
    X = jnp.concatenate([r[:, None, :], h], axis=1)                 # [B, A, X]

    def gconv(x, w_rel, b_rel, w_root):
        agg = jnp.sum(x, axis=1, keepdims=True) - x
        return (jnp.dot(agg, w_rel, precision=hp) + b_rel
                + jnp.dot(x, w_root, precision=hp))

    h1 = jax.nn.relu(gconv(X, g1_rel_w, g1_rel_b, g1_root_w))
    h2 = jax.nn.relu(gconv(h1, g2_rel_w, g2_rel_b, g2_root_w))
    v = jax.nn.relu(jnp.dot(h2[:, 0, :], v0_w, precision=hp) + v0_b)
    return jnp.dot(v, v1_w, precision=hp) + v1_b


if __name__ == "__main__":
    key = jax.random.PRNGKey(0)
    k_state, k_params = jax.random.split(key)
    # state: [batch, num_humans, input_dim]  (input_dim = self_state_dim + human_state_dim)
    state = jax.random.normal(k_state, (B, N_HUMANS, INPUT_DIM), dtype=jnp.float32)
    raw = make_params(k_params)
    w_slab, b_slab = pack_params(raw)      # packed once, reused on every forward call

    value = value_network_forward(state, w_slab, b_slab)
    jax.block_until_ready(value)

    assert value.shape == (B, OUT_DIM)
    assert bool(jnp.all(jnp.isfinite(value)))
    ref = reference_forward(state, raw)
    assert bool(jnp.allclose(value, ref, rtol=1e-3, atol=1e-3)), (value, ref)
    print("KERNEL_OK")
</pallas_src>

<mosaic_0001>
module attributes {stable_mosaic.version = 11 : i64} {
  func.func @kernel(%arg0: i32, %arg1: memref<1x96x8xf32, #tpu.memory_space<vmem>>, %arg2: memref<10x64x64xf32, #tpu.memory_space<vmem>>, %arg3: memref<8x64xf32, #tpu.memory_space<vmem>>, %arg4: memref<16x64xf32, #tpu.memory_space<vmem>>, %arg5: memref<96x64xf32, #tpu.memory_space<vmem>>) attributes {dimension_semantics = [#tpu.dimension_semantics<parallel>], iteration_bounds = array<i64: 1>, scalar_prefetch = 0 : i64, scratch_operands = 1 : i64, tpu.core_type = #tpu.core_type<tc>, window_params = [{transform_indices = @transform_0, window_bounds = array<i64: 1, 96, 8>}, {pipeline_mode = #tpu.pipeline_mode<synchronous>, transform_indices = @transform_1, window_bounds = array<i64: 10, 64, 64>}, {pipeline_mode = #tpu.pipeline_mode<synchronous>, transform_indices = @transform_2, window_bounds = array<i64: 8, 64>}, {transform_indices = @transform_3, window_bounds = array<i64: 16, 64>}]} {
    %c0 = arith.constant 0 : index
    %c0_0 = arith.constant 0 : index
    %c0_1 = arith.constant 0 : index
    %0 = vector.load %arg1[%c0, %c0_0, %c0_1] : memref<1x96x8xf32, #tpu.memory_space<vmem>>, vector<1x16x8xf32>
    %1 = vector.shape_cast %0 : vector<1x16x8xf32> to vector<16x8xf32>
    %c0_2 = arith.constant 0 : index
    %c0_3 = arith.constant 0 : index
    %c0_4 = arith.constant 0 : index
    %2 = vector.load %arg2[%c0_2, %c0_3, %c0_4] : memref<10x64x64xf32, #tpu.memory_space<vmem>>, vector<1x8x64xf32>
    %3 = vector.shape_cast %2 : vector<1x8x64xf32> to vector<8x64xf32>
    %cst = arith.constant dense<0.000000e+00> : vector<16x64xf32>
    %4 = tpu.matmul %1, %3, %cst {dimension_numbers = #tpu.dot_dimension_numbers<[1], [0], [0], [1], [0, 0, 1, 1], [], []>} : vector<16x8xf32>, vector<8x64xf32>, vector<16x64xf32> -> vector<16x64xf32>
    %c0_5 = arith.constant 0 : index
    %c0_6 = arith.constant 0 : index
    %5 = vector.load %arg3[%c0_5, %c0_6] : memref<8x64xf32, #tpu.memory_space<vmem>>, vector<1x64xf32>
    %6 = vector.broadcast %5 : vector<1x64xf32> to vector<16x64xf32>
    %7 = arith.addf %4, %6 : vector<16x64xf32>
    %cst_7 = arith.constant 0.000000e+00 : f32
    %8 = vector.broadcast %cst_7 : f32 to vector<16x64xf32>
    %9 = arith.maximumf %7, %8 : vector<16x64xf32>
    %c1 = arith.constant 1 : index
    %c0_8 = arith.constant 0 : index
    %c0_9 = arith.constant 0 : index
    %10 = vector.load %arg2[%c1, %c0_8, %c0_9] : memref<10x64x64xf32, #tpu.memory_space<vmem>>, vector<1x64x64xf32>
    %11 = vector.shape_cast %10 : vector<1x64x64xf32> to vector<64x64xf32>
    %cst_10 = arith.constant dense<0.000000e+00> : vector<16x64xf32>
    %12 = tpu.matmul %9, %11, %cst_10 {dimension_numbers = #tpu.dot_dimension_numbers<[1], [0], [0], [1], [0, 0, 1, 1], [], []>} : vector<16x64xf32>, vector<64x64xf32>, vector<16x64xf32> -> vector<16x64xf32>
    %c1_11 = arith.constant 1 : index
    %c0_12 = arith.constant 0 : index
    %13 = vector.load %arg3[%c1_11, %c0_12] : memref<8x64xf32, #tpu.memory_space<vmem>>, vector<1x64xf32>
    %14 = vector.broadcast %13 : vector<1x64xf32> to vector<16x64xf32>
    %15 = arith.addf %12, %14 : vector<16x64xf32>
    %cst_13 = arith.constant 0.000000e+00 : f32
    %16 = vector.broadcast %cst_13 : f32 to vector<16x64xf32>
    %17 = arith.maximumf %15, %16 : vector<16x64xf32>
    %c0_14 = arith.constant 0 : index
    %c16 = arith.constant 16 : index
    %c0_15 = arith.constant 0 : index
    %18 = vector.load %arg1[%c0_14, %c16, %c0_15] : memref<1x96x8xf32, #tpu.memory_space<vmem>>, vector<1x80x8xf32>
    %19 = vector.shape_cast %18 : vector<1x80x8xf32> to vector<80x8xf32>
    %c2 = arith.constant 2 : index
    %c0_16 = arith.constant 0 : index
    %c0_17 = arith.constant 0 : index
    %20 = vector.load %arg2[%c2, %c0_16, %c0_17] : memref<10x64x64xf32, #tpu.memory_space<vmem>>, vector<1x8x64xf32>
    %21 = vector.shape_cast %20 : vector<1x8x64xf32> to vector<8x64xf32>
    %cst_18 = arith.constant dense<0.000000e+00> : vector<80x64xf32>
    %22 = tpu.matmul %19, %21, %cst_18 {dimension_numbers = #tpu.dot_dimension_numbers<[1], [0], [0], [1], [0, 0, 1, 1], [], []>} : vector<80x8xf32>, vector<8x64xf32>, vector<80x64xf32> -> vector<80x64xf32>
    %c2_19 = arith.constant 2 : index
    %c0_20 = arith.constant 0 : index
    %23 = vector.load %arg3[%c2_19, %c0_20] : memref<8x64xf32, #tpu.memory_space<vmem>>, vector<1x64xf32>
    %24 = vector.broadcast %23 : vector<1x64xf32> to vector<80x64xf32>
    %25 = arith.addf %22, %24 : vector<80x64xf32>
    %cst_21 = arith.constant 0.000000e+00 : f32
    %26 = vector.broadcast %cst_21 : f32 to vector<80x64xf32>
    %27 = arith.maximumf %25, %26 : vector<80x64xf32>
    %c3 = arith.constant 3 : index
    %c0_22 = arith.constant 0 : index
    %c0_23 = arith.constant 0 : index
    %28 = vector.load %arg2[%c3, %c0_22, %c0_23] : memref<10x64x64xf32, #tpu.memory_space<vmem>>, vector<1x64x64xf32>
    %29 = vector.shape_cast %28 : vector<1x64x64xf32> to vector<64x64xf32>
    %cst_24 = arith.constant dense<0.000000e+00> : vector<80x64xf32>
    %30 = tpu.matmul %27, %29, %cst_24 {dimension_numbers = #tpu.dot_dimension_numbers<[1], [0], [0], [1], [0, 0, 1, 1], [], []>} : vector<80x64xf32>, vector<64x64xf32>, vector<80x64xf32> -> vector<80x64xf32>
    %c3_25 = arith.constant 3 : index
    %c0_26 = arith.constant 0 : index
    %31 = vector.load %arg3[%c3_25, %c0_26] : memref<8x64xf32, #tpu.memory_space<vmem>>, vector<1x64xf32>
    %32 = vector.broadcast %31 : vector<1x64xf32> to vector<80x64xf32>
    %33 = arith.addf %30, %32 : vector<80x64xf32>
    %cst_27 = arith.constant 0.000000e+00 : f32
    %34 = vector.broadcast %cst_27 : f32 to vector<80x64xf32>
    %35 = arith.maximumf %33, %34 : vector<80x64xf32>
    %c0_28 = arith.constant 0 : index
    %c0_29 = arith.constant 0 : index
    %36 = vector.load %arg5[%c0_28, %c0_29] : memref<96x64xf32, #tpu.memory_space<vmem>>, vector<16x64xf32>
    tpu.vector_store %arg5[%c0_28, %c0_29], %17 {strides = array<i32>} : memref<96x64xf32, #tpu.memory_space<vmem>>, vector<16x64xf32>,
    %c16_30 = arith.constant 16 : index
    %c0_31 = arith.constant 0 : index
    %37 = vector.load %arg5[%c16_30, %c0_31] : memref<96x64xf32, #tpu.memory_space<vmem>>, vector<80x64xf32>
    tpu.vector_store %arg5[%c16_30, %c0_31], %35 {strides = array<i32>} : memref<96x64xf32, #tpu.memory_space<vmem>>, vector<80x64xf32>,
    %c0_32 = arith.constant 0 : index
    %c0_33 = arith.constant 0 : index
    %38 = vector.load %arg5[%c0_32, %c0_33] : memref<96x64xf32, #tpu.memory_space<vmem>>, vector<96x64xf32>
    %39 = vector.shape_cast %38 : vector<96x64xf32> to vector<6x16x64xf32>
    %cst_34 = arith.constant dense<0.000000e+00> : vector<16x64xf32>
    %40 = vector.multi_reduction <add>, %39, %cst_34 [0] : vector<6x16x64xf32> to vector<16x64xf32>
    %41 = vector.shape_cast %40 : vector<16x64xf32> to vector<1x16x64xf32>
    %42 = vector.broadcast %41 : vector<1x16x64xf32> to vector<6x16x64xf32>
    %43 = arith.subf %42, %39 : vector<6x16x64xf32>
    %44 = vector.shape_cast %43 : vector<6x16x64xf32> to vector<96x64xf32>
    %c4 = arith.constant 4 : index
    %c0_35 = arith.constant 0 : index
    %c0_36 = arith.constant 0 : index
    %45 = vector.load %arg2[%c4, %c0_35, %c0_36] : memref<10x64x64xf32, #tpu.memory_space<vmem>>, vector<1x64x64xf32>
    %46 = vector.shape_cast %45 : vector<1x64x64xf32> to vector<64x64xf32>
    %cst_37 = arith.constant dense<0.000000e+00> : vector<96x64xf32>
    %47 = tpu.matmul %44, %46, %cst_37 {dimension_numbers = #tpu.dot_dimension_numbers<[1], [0], [0], [1], [0, 0, 1, 1], [], []>} : vector<96x64xf32>, vector<64x64xf32>, vector<96x64xf32> -> vector<96x64xf32>
    %c5 = arith.constant 5 : index
    %c0_38 = arith.constant 0 : index
    %c0_39 = arith.constant 0 : index
    %48 = vector.load %arg2[%c5, %c0_38, %c0_39] : memref<10x64x64xf32, #tpu.memory_space<vmem>>, vector<1x64x64xf32>
    %49 = vector.shape_cast %48 : vector<1x64x64xf32> to vector<64x64xf32>
    %cst_40 = arith.constant dense<0.000000e+00> : vector<96x64xf32>
    %50 = tpu.matmul %38, %49, %cst_40 {dimension_numbers = #tpu.dot_dimension_numbers<[1], [0], [0], [1], [0, 0, 1, 1], [], []>} : vector<96x64xf32>, vector<64x64xf32>, vector<96x64xf32> -> vector<96x64xf32>
    %51 = arith.addf %47, %50 : vector<96x64xf32>
    %c4_41 = arith.constant 4 : index
    %c0_42 = arith.constant 0 : index
    %52 = vector.load %arg3[%c4_41, %c0_42] : memref<8x64xf32, #tpu.memory_space<vmem>>, vector<1x64xf32>
    %53 = vector.broadcast %52 : vector<1x64xf32> to vector<96x64xf32>
    %54 = arith.addf %51, %53 : vector<96x64xf32>
    %cst_43 = arith.constant 0.000000e+00 : f32
    %55 = vector.broadcast %cst_43 : f32 to vector<96x64xf32>
    %56 = arith.maximumf %54, %55 : vector<96x64xf32>
    %57 = vector.shape_cast %56 : vector<96x64xf32> to vector<6x16x64xf32>
    %cst_44 = arith.constant dense<0.000000e+00> : vector<16x64xf32>
    %58 = vector.multi_reduction <add>, %57, %cst_44 [0] : vector<6x16x64xf32> to vector<16x64xf32>
    %59 = vector.shape_cast %58 : vector<16x64xf32> to vector<1x16x64xf32>
    %60 = vector.broadcast %59 : vector<1x16x64xf32> to vector<6x16x64xf32>
    %61 = arith.subf %60, %57 : vector<6x16x64xf32>
    %62 = vector.shape_cast %61 : vector<6x16x64xf32> to vector<96x64xf32>
    %c6 = arith.constant 6 : index
    %c0_45 = arith.constant 0 : index
    %c0_46 = arith.constant 0 : index
    %63 = vector.load %arg2[%c6, %c0_45, %c0_46] : memref<10x64x64xf32, #tpu.memory_space<vmem>>, vector<1x64x64xf32>
    %64 = vector.shape_cast %63 : vector<1x64x64xf32> to vector<64x64xf32>
    %cst_47 = arith.constant dense<0.000000e+00> : vector<96x64xf32>
    %65 = tpu.matmul %62, %64, %cst_47 {dimension_numbers = #tpu.dot_dimension_numbers<[1], [0], [0], [1], [0, 0, 1, 1], [], []>} : vector<96x64xf32>, vector<64x64xf32>, vector<96x64xf32> -> vector<96x64xf32>
    %c7 = arith.constant 7 : index
    %c0_48 = arith.constant 0 : index
    %c0_49 = arith.constant 0 : index
    %66 = vector.load %arg2[%c7, %c0_48, %c0_49] : memref<10x64x64xf32, #tpu.memory_space<vmem>>, vector<1x64x64xf32>
    %67 = vector.shape_cast %66 : vector<1x64x64xf32> to vector<64x64xf32>
    %cst_50 = arith.constant dense<0.000000e+00> : vector<96x64xf32>
    %68 = tpu.matmul %56, %67, %cst_50 {dimension_numbers = #tpu.dot_dimension_numbers<[1], [0], [0], [1], [0, 0, 1, 1], [], []>} : vector<96x64xf32>, vector<64x64xf32>, vector<96x64xf32> -> vector<96x64xf32>
    %69 = arith.addf %65, %68 : vector<96x64xf32>
    %c5_51 = arith.constant 5 : index
    %c0_52 = arith.constant 0 : index
    %70 = vector.load %arg3[%c5_51, %c0_52] : memref<8x64xf32, #tpu.memory_space<vmem>>, vector<1x64xf32>
    %71 = vector.broadcast %70 : vector<1x64xf32> to vector<96x64xf32>
    %72 = arith.addf %69, %71 : vector<96x64xf32>
    %cst_53 = arith.constant 0.000000e+00 : f32
    %73 = vector.broadcast %cst_53 : f32 to vector<96x64xf32>
    %74 = arith.maximumf %72, %73 : vector<96x64xf32>
    %75 = vector.extract_strided_slice %74 {offsets = [0, 0], sizes = [16, 64], strides = [1, 1]} : vector<96x64xf32> to vector<16x64xf32>
    %c8 = arith.constant 8 : index
    %c0_54 = arith.constant 0 : index
    %c0_55 = arith.constant 0 : index
    %76 = vector.load %arg2[%c8, %c0_54, %c0_55] : memref<10x64x64xf32, #tpu.memory_space<vmem>>, vector<1x64x64xf32>
    %77 = vector.shape_cast %76 : vector<1x64x64xf32> to vector<64x64xf32>
    %cst_56 = arith.constant dense<0.000000e+00> : vector<16x64xf32>
    %78 = tpu.matmul %75, %77, %cst_56 {dimension_numbers = #tpu.dot_dimension_numbers<[1], [0], [0], [1], [0, 0, 1, 1], [], []>} : vector<16x64xf32>, vector<64x64xf32>, vector<16x64xf32> -> vector<16x64xf32>
    %c6_57 = arith.constant 6 : index
    %c0_58 = arith.constant 0 : index
    %79 = vector.load %arg3[%c6_57, %c0_58] : memref<8x64xf32, #tpu.memory_space<vmem>>, vector<1x64xf32>
    %80 = vector.broadcast %79 : vector<1x64xf32> to vector<16x64xf32>
    %81 = arith.addf %78, %80 : vector<16x64xf32>
    %cst_59 = arith.constant 0.000000e+00 : f32
    %82 = vector.broadcast %cst_59 : f32 to vector<16x64xf32>
    %83 = arith.maximumf %81, %82 : vector<16x64xf32>
    %c9 = arith.constant 9 : index
    %c0_60 = arith.constant 0 : index
    %c0_61 = arith.constant 0 : index
    %84 = vector.load %arg2[%c9, %c0_60, %c0_61] : memref<10x64x64xf32, #tpu.memory_space<vmem>>, vector<1x64x64xf32>
    %85 = vector.shape_cast %84 : vector<1x64x64xf32> to vector<64x64xf32>
    %cst_62 = arith.constant dense<0.000000e+00> : vector<16x64xf32>
    %86 = tpu.matmul %83, %85, %cst_62 {dimension_numbers = #tpu.dot_dimension_numbers<[1], [0], [0], [1], [0, 0, 1, 1], [], []>} : vector<16x64xf32>, vector<64x64xf32>, vector<16x64xf32> -> vector<16x64xf32>
    %c7_63 = arith.constant 7 : index
    %c0_64 = arith.constant 0 : index
    %87 = vector.load %arg3[%c7_63, %c0_64] : memref<8x64xf32, #tpu.memory_space<vmem>>, vector<1x64xf32>
    %88 = vector.broadcast %87 : vector<1x64xf32> to vector<16x64xf32>
    %89 = arith.addf %86, %88 : vector<16x64xf32>
    %c0_65 = arith.constant 0 : index
    %c0_66 = arith.constant 0 : index
    %90 = vector.load %arg4[%c0_65, %c0_66] : memref<16x64xf32, #tpu.memory_space<vmem>>, vector<16x64xf32>
    tpu.vector_store %arg4[%c0_65, %c0_66], %89 {strides = array<i32>} : memref<16x64xf32, #tpu.memory_space<vmem>>, vector<16x64xf32>,
    return
  }
  func.func @transform_0(%arg0: i32) -> (i32, i32, i32) {
    %c0_i32 = arith.constant 0 : i32
    %c0_i32_0 = arith.constant 0 : i32
    %c0_i32_1 = arith.constant 0 : i32
    return %arg0, %c0_i32, %c0_i32_0 : i32, i32, i32
  }
  func.func @transform_1(%arg0: i32) -> (i32, i32, i32) {
    %c0_i32 = arith.constant 0 : i32
    %c0_i32_0 = arith.constant 0 : i32
    %c0_i32_1 = arith.constant 0 : i32
    %c0_i32_2 = arith.constant 0 : i32
    return %c0_i32, %c0_i32_0, %c0_i32_1 : i32, i32, i32
  }
  func.func @transform_2(%arg0: i32) -> (i32, i32) {
    %c0_i32 = arith.constant 0 : i32
    %c0_i32_0 = arith.constant 0 : i32
    %c0_i32_1 = arith.constant 0 : i32
    return %c0_i32, %c0_i32_0 : i32, i32
  }
  func.func @transform_3(%arg0: i32) -> (i32, i32) {
    %c0_i32 = arith.constant 0 : i32
    %c0_i32_0 = arith.constant 0 : i32
    return %arg0, %c0_i32 : i32, i32
  }
}

</mosaic_0001>

<llo_original>
// kernel: value_network_forward.1
$region0: #{value_network_forward.1}
  #allocation0 [shape = 'u32[]', space=smem, size = 0x4, offset = 0x4, fixed_abs, tag = 'smem constant byte address 0x4 - core index']
  #allocation1 [shape = 'u32[144,128]{1,0:T(1,128)}', space=vmem, size = 0x12000, scoped, tag = 'internal scratch']
  #allocation2 [shape = 'f32[96,64]{1,0:T(8,128)}', space=vmem, size = 0xc000, scoped, tag = 'scratch operand']
  %s0 = inlined_call_operand.vmem [shape: f32[1,96,8], index: 0, kind: input, shape index: {}]
  %s1 = inlined_call_operand.hbm [shape: f32[10,64,64], index: 1, kind: input, shape index: {}]
  %s2 = inlined_call_operand.vmem [shape: f32[8,64], index: 2, kind: input, shape index: {}]
  %s3 = inlined_call_operand.vmem [shape: f32[16,64], index: 3, kind: output, shape index: {}]
  %s4 = sld [smem:[#allocation0]]
  $region26: #{value_network_forward.1} parent=0
    _
  %s6 = ssub.s32 1, %s4
  %s7 = scalar_select 0, %s6, %s4
  $region1: #{value_network_forward.1} parent=0
    #allocation3 [shape = 'u8[327680]{0}', space=vmem, size = 0x50000, scoped, tag = 'input window, operand 1, single buffered']
    #allocation4 [shape = 's32[1]{0}', space=sflag, size = 0x4, scoped, tag = 'scoped memory for value_network_forward.1']
    %8 = vsyncpa [#allocation4], 0
    // Predicated region
    $region2: #{value_network_forward.1} parent=1 // pred_check
      _
    $region3: #{value_network_forward.1} parent=1 // pred_check_branch
      %10 = sbr.rel (0) target = $region5
    $region4: #{value_network_forward.1} parent=1 // pred_region
      _
    $region5: #{value_network_forward.1} parent=1 // pred_fallthru
      _
    // Predicated region
    $region6: #{value_network_forward.1} parent=1 // pred_check
      _
    $region7: #{value_network_forward.1} parent=1 // pred_check_branch
      %12 = sbr.rel (0) target = $region9
    $region8: #{value_network_forward.1} parent=1 // pred_region
      %s14 = ssub.s32 10240, 10240
      %15 = vsyncadd [#allocation4], %s14
      %s16 = sshll.u32 [#allocation3], 4
      %s17 = int_to_ptr.vmem [resolvable:$true] %s16
      %22 = dma.hbm_to_vmem [thread:$0]  %s1, 10240, %s17, [#allocation4], 128, 128, 8
    $region9: #{value_network_forward.1} parent=1 // pred_fallthru
      _
    // Predicated region
    $region10: #{value_network_forward.1} parent=1 // pred_check
      _
    $region11: #{value_network_forward.1} parent=1 // pred_check_branch
      %24 = sbr.rel (0) target = $region13
    $region12: #{value_network_forward.1} parent=1 // pred_region
      _
    $region13: #{value_network_forward.1} parent=1 // pred_fallthru
      _
    // Predicated region
    $region14: #{value_network_forward.1} parent=1 // pred_check
      _
    $region15: #{value_network_forward.1} parent=1 // pred_check_branch
      %26 = sbr.rel (0) target = $region17
    $region16: #{value_network_forward.1} parent=1 // pred_region
      %27 = dma.done [#allocation4], 10240
    $region17: #{value_network_forward.1} parent=1 // pred_fallthru
      _
    %v28 = vld [vmem:[%s0] sm:$0xff]
    %v29 = vld [vmem:[%s0 + $0x8] sm:$0xff]
    %v30 = vld [vmem:[#allocation3] sm:$0xff]
    %v31 = vld [vmem:[%s2] sm:$0x1]
    %v32 = vlaneseq
    %v33 = vshrl.u32 %v32, 7
    %v34 = vsub.s32 0, %v33
    %v35 = vrot.slane %v31, %v34
    %vm36 = vcmask 64512
    %v38 = vsel %vm36, %v28, 0
    %v41 = vsel %vm36, %v29, 0
    %43 = vmatprep.subr.mxu0 0.0
    %44 = vmatpush1.msra.mxu0 %v30
    %45 = vmatprep.subr.mxu0 0.0
    %46 = vmatpush1.msra.mxu0 0.0
    %47 = vmatprep.subr.mxu0 0.0
    %48 = vmatpush1.msra.mxu0 0.0
    %49 = vmatprep.subr.mxu0 0.0
    %50 = vmatpush1.msra.mxu0 0.0
    %51 = vmatprep.subr.mxu0 0.0
    %52 = vmatpush1.msra.mxu0 0.0
    %53 = vmatprep.subr.mxu0 0.0
    %54 = vmatpush1.msra.mxu0 0.0
    %55 = vmatprep.subr.mxu0 0.0
    %56 = vmatpush1.msra.mxu0 0.0
    %57 = vmatprep.subr.mxu0 0.0
    %58 = vmatpush1.msra.mxu0 0.0
    %59 = vmatprep.subr.mxu0 0.0
    %60 = vmatpush1.msra.mxu0 0.0
    %61 = vmatprep.subr.mxu0 0.0
    %62 = vmatpush1.msra.mxu0 0.0
    %63 = vmatprep.subr.mxu0 0.0
    %64 = vmatpush1.msra.mxu0 0.0
    %65 = vmatprep.subr.mxu0 0.0
    %66 = vmatpush1.msra.mxu0 0.0
    %67 = vmatprep.subr.mxu0 0.0
    %68 = vmatpush1.msra.mxu0 0.0
    %69 = vmatprep.subr.mxu0 0.0
    %70 = vmatpush1.msra.mxu0 0.0
    %71 = vmatprep.subr.mxu0 0.0
    %72 = vmatpush1.msra.mxu0 0.0
    %73 = vmatprep.subr.mxu0 0.0
    %74 = vmatpush1.msra.mxu0 0.0
    %75 = vmatprep.subr.mxu0 0.0
    %76 = vmatpush1.msra.mxu0 0.0
    %77 = vmatprep.subr.mxu0 0.0
    %78 = vmatpush1.msra.mxu0 0.0
    %79 = vmatprep.subr.mxu0 0.0
    %80 = vmatpush1.msra.mxu0 0.0
    %81 = vmatprep.subr.mxu0 0.0
    %82 = vmatpush1.msra.mxu0 0.0
    %83 = vmatprep.subr.mxu0 0.0
    %84 = vmatpush1.msra.mxu0 0.0
    %85 = vmatprep.subr.mxu0 0.0
    %86 = vmatpush1.msra.mxu0 0.0
    %87 = vmatprep.subr.mxu0 0.0
    %88 = vmatpush1.msra.mxu0 0.0
    %89 = vmatprep.subr.mxu0 0.0
    %90 = vmatpush1.msra.mxu0 0.0
    %91 = vmatprep.subr.mxu0 0.0
    %92 = vmatpush1.msra.mxu0 0.0
    %93 = vmatprep.subr.mxu0 0.0
    %94 = vmatpush1.msra.mxu0 0.0
    %95 = vmatprep.subr.mxu0 0.0
    %96 = vmatpush1.msra.mxu0 0.0
    %97 = vmatprep.subr.mxu0 0.0
    %98 = vmatpush1.msra.mxu0 0.0
    %99 = vmatprep.subr.mxu0 0.0
    %100 = vmatpush1.msra.mxu0 0.0
    %101 = vmatprep.subr.mxu0 0.0
    %102 = vmatpush1.msra.mxu0 0.0
    %103 = vmatprep.subr.mxu0 0.0
    %104 = vmatpush1.msra.mxu0 0.0
    %105 = vmatprep.subr.mxu0 0.0
    %106 = vmatpush1.msra.mxu0 0.0
    %107 = vmatprep.mubr.f32.mxu0 0.0
    %108 = vmatmul.mubr.f32.gmra.mrb[0].mxu0 %v38
    %v109 = vpop.f32.mrb[0].mxu0
    %v110 = vadd.f32 %v35, %v109
    %v111 = vpop.f32.mrb[0].mxu0
    %112 = vmatprep.mubr.f32.mxu0 0.0
    %113 = vmatmul.mubr.f32.gmra.mrb[0].mxu0 %v41
    %v114 = vpop.f32.mrb[0].mxu0
    %v115 = vadd.f32 %v35, %v114
    %v116 = vpop.f32.mrb[0].mxu0
    %117 = vdwg.mxu0
    %v118 = vmax.f32 %v110, 0.0
    %v119 = vmax.f32 %v115, 0.0
    %s120 = scalar_lea.vmem [#allocation3], 64
    %v121 = vld [vmem:[%s120] sm:$0xff]
    %v122 = vld [vmem:[%s120 + $0x8] sm:$0xff]
    %v123 = vld [vmem:[%s120 + $0x10] sm:$0xff]
    %v124 = vld [vmem:[%s120 + $0x18] sm:$0xff]
    %v125 = vld [vmem:[%s120 + $0x20] sm:$0xff]
    %v126 = vld [vmem:[%s120 + $0x28] sm:$0xff]
    %v127 = vld [vmem:[%s120 + $0x30] sm:$0xff]
    %v128 = vld [vmem:[%s120 + $0x38] sm:$0xff]
    %v129 = vld [vmem:[%s2 + $0x1] sm:$0x1]
    %v130 = vlaneseq
    %v131 = vshrl.u32 %v130, 7
    %v132 = vsub.s32 0, %v131
    %v133 = vrot.slane %v129, %v132
    %vm134 = vcmask 523264
    %v136 = vsel %vm134, %v118, 0
    %v139 = vsel %vm134, %v119, 0
    %141 = vmatprep.subr.mxu0 0.0
    %142 = vmatpush1.msra.mxu0 %v121
    %143 = vmatprep.subr.mxu0 0.0
    %144 = vmatpush1.msra.mxu0 %v122
    %145 = vmatprep.subr.mxu0 0.0
    %146 = vmatpush1.msra.mxu0 %v123
    %147 = vmatprep.subr.mxu0 0.0
    %148 = vmatpush1.msra.mxu0 %v124
    %149 = vmatprep.subr.mxu0 0.0
    %150 = vmatpush1.msra.mxu0 %v125
    %151 = vmatprep.subr.mxu0 0.0
    %152 = vmatpush1.msra.mxu0 %v126
    %153 = vmatprep.subr.mxu0 0.0
    %154 = vmatpush1.msra.mxu0 %v127
    %155 = vmatprep.subr.mxu0 0.0
    %156 = vmatpush1.msra.mxu0 %v128
    %157 = vmatprep.subr.mxu0 0.0
    %158 = vmatpush1.msra.mxu0 0.0
    %159 = vmatprep.subr.mxu0 0.0
    %160 = vmatpush1.msra.mxu0 0.0
    %161 = vmatprep.subr.mxu0 0.0
    %162 = vmatpush1.msra.mxu0 0.0
    %163 = vmatprep.subr.mxu0 0.0
    %164 = vmatpush1.msra.mxu0 0.0
    %165 = vmatprep.subr.mxu0 0.0
    %166 = vmatpush1.msra.mxu0 0.0
    %167 = vmatprep.subr.mxu0 0.0
    %168 = vmatpush1.msra.mxu0 0.0
    %169 = vmatprep.subr.mxu0 0.0
    %170 = vmatpush1.msra.mxu0 0.0
    %171 = vmatprep.subr.mxu0 0.0
    %172 = vmatpush1.msra.mxu0 0.0
    %173 = vmatprep.subr.mxu0 0.0
    %174 = vmatpush1.msra.mxu0 0.0
    %175 = vmatprep.subr.mxu0 0.0
    %176 = vmatpush1.msra.mxu0 0.0
    %177 = vmatprep.subr.mxu0 0.0
    %178 = vmatpush1.msra.mxu0 0.0
    %179 = vmatprep.subr.mxu0 0.0
    %180 = vmatpush1.msra.mxu0 0.0
    %181 = vmatprep.subr.mxu0 0.0
    %182 = vmatpush1.msra.mxu0 0.0
    %183 = vmatprep.subr.mxu0 0.0
    %184 = vmatpush1.msra.mxu0 0.0
    %185 = vmatprep.subr.mxu0 0.0
    %186 = vmatpush1.msra.mxu0 0.0
    %187 = vmatprep.subr.mxu0 0.0
    %188 = vmatpush1.msra.mxu0 0.0
    %189 = vmatprep.subr.mxu0 0.0
    %190 = vmatpush1.msra.mxu0 0.0
    %191 = vmatprep.subr.mxu0 0.0
    %192 = vmatpush1.msra.mxu0 0.0
    %193 = vmatprep.subr.mxu0 0.0
    %194 = vmatpush1.msra.mxu0 0.0
    %195 = vmatprep.subr.mxu0 0.0
    %196 = vmatpush1.msra.mxu0 0.0
    %197 = vmatprep.subr.mxu0 0.0
    %198 = vmatpush1.msra.mxu0 0.0
    %199 = vmatprep.subr.mxu0 0.0
    %200 = vmatpush1.msra.mxu0 0.0
    %201 = vmatprep.subr.mxu0 0.0
    %202 = vmatpush1.msra.mxu0 0.0
    %203 = vmatprep.subr.mxu0 0.0
    %204 = vmatpush1.msra.mxu0 0.0
    %205 = vmatprep.mubr.f32.mxu0 0.0
    %206 = vmatmul.mubr.f32.gmra.mrb[0].mxu0 %v136
    %v207 = vpop.f32.mrb[0].mxu0
    %v208 = vadd.f32 %v133, %v207
    %v209 = vpop.f32.mrb[0].mxu0
    %210 = vmatprep.mubr.f32.mxu0 0.0
    %211 = vmatmul.mubr.f32.gmra.mrb[0].mxu0 %v139
    %v212 = vpop.f32.mrb[0].mxu0
    %v213 = vadd.f32 %v133, %v212
    %v214 = vpop.f32.mrb[0].mxu0
    %215 = vdwg.mxu0
    %v216 = vmax.f32 %v208, 0.0
    %v217 = vmax.f32 %v213, 0.0
    %v218 = vld [vmem:[%s0 + $0x10] sm:$0xff]
    %v219 = vld [vmem:[%s0 + $0x18] sm:$0xff]
    %v220 = vld [vmem:[%s0 + $0x20] sm:$0xff]
    %v221 = vld [vmem:[%s0 + $0x28] sm:$0xff]
    %v222 = vld [vmem:[%s0 + $0x30] sm:$0xff]
    %v223 = vld [vmem:[%s0 + $0x38] sm:$0xff]
    %v224 = vld [vmem:[%s0 + $0x40] sm:$0xff]
    %v225 = vld [vmem:[%s0 + $0x48] sm:$0xff]
    %v226 = vld [vmem:[%s0 + $0x50] sm:$0xff]
    %v227 = vld [vmem:[%s0 + $0x58] sm:$0xff]
    %s228 = scalar_lea.vmem [#allocation3], 128
    %v229 = vld [vmem:[%s228] sm:$0xff]
    %v230 = vld [vmem:[%s2 + $0x2] sm:$0x1]
    %v231 = vlaneseq
    %v232 = vshrl.u32 %v231, 7
    %v233 = vsub.s32 0, %v232
    %v234 = vrot.slane %v230, %v233
    %v236 = vsel %vm36, %v218, 0
    %v239 = vsel %vm36, %v219, 0
    %v242 = vsel %vm36, %v220, 0
    %v245 = vsel %vm36, %v221, 0
    %v248 = vsel %vm36, %v222, 0
    %v251 = vsel %vm36, %v223, 0
    %v254 = vsel %vm36, %v224, 0
    %v257 = vsel %vm36, %v225, 0
    %v260 = vsel %vm36, %v226, 0
    %v263 = vsel %vm36, %v227, 0
    %265 = vmatprep.subr.mxu0 0.0
    %266 = vmatpush1.msra.mxu0 %v229
    %267 = vmatprep.subr.mxu0 0.0
    %268 = vmatpush1.msra.mxu0 0.0
    %269 = vmatprep.subr.mxu0 0.0
    %270 = vmatpush1.msra.mxu0 0.0
    %271 = vmatprep.subr.mxu0 0.0
    %272 = vmatpush1.msra.mxu0 0.0
    %273 = vmatprep.subr.mxu0 0.0
    %274 = vmatpush1.msra.mxu0 0.0
    %275 = vmatprep.subr.mxu0 0.0
    %276 = vmatpush1.msra.mxu0 0.0
    %277 = vmatprep.subr.mxu0 0.0
    %278 = vmatpush1.msra.mxu0 0.0
    %279 = vmatprep.subr.mxu0 0.0
    %280 = vmatpush1.msra.mxu0 0.0
    %281 = vmatprep.subr.mxu0 0.0
    %282 = vmatpush1.msra.mxu0 0.0
    %283 = vmatprep.subr.mxu0 0.0
    %284 = vmatpush1.msra.mxu0 0.0
    %285 = vmatprep.subr.mxu0 0.0
    %286 = vmatpush1.msra.mxu0 0.0
    %287 = vmatprep.subr.mxu0 0.0
    %288 = vmatpush1.msra.mxu0 0.0
    %289 = vmatprep.subr.mxu0 0.0
    %290 = vmatpush1.msra.mxu0 0.0
    %291 = vmatprep.subr.mxu0 0.0
    %292 = vmatpush1.msra.mxu0 0.0
    %293 = vmatprep.subr.mxu0 0.0
    %294 = vmatpush1.msra.mxu0 0.0
    %295 = vmatprep.subr.mxu0 0.0
    %296 = vmatpush1.msra.mxu0 0.0
    %297 = vmatprep.subr.mxu0 0.0
    %298 = vmatpush1.msra.mxu0 0.0
    %299 = vmatprep.subr.mxu0 0.0
    %300 = vmatpush1.msra.mxu0 0.0
    %301 = vmatprep.subr.mxu0 0.0
    %302 = vmatpush1.msra.mxu0 0.0
    %303 = vmatprep.subr.mxu0 0.0
    %304 = vmatpush1.msra.mxu0 0.0
    %305 = vmatprep.subr.mxu0 0.0
    %306 = vmatpush1.msra.mxu0 0.0
    %307 = vmatprep.subr.mxu0 0.0
    %308 = vmatpush1.msra.mxu0 0.0
    %309 = vmatprep.subr.mxu0 0.0
    %310 = vmatpush1.msra.mxu0 0.0
    %311 = vmatprep.subr.mxu0 0.0
    %312 = vmatpush1.msra.mxu0 0.0
    %313 = vmatprep.subr.mxu0 0.0
    %314 = vmatpush1.msra.mxu0 0.0
    %315 = vmatprep.subr.mxu0 0.0
    %316 = vmatpush1.msra.mxu0 0.0
    %317 = vmatprep.subr.mxu0 0.0
    %318 = vmatpush1.msra.mxu0 0.0
    %319 = vmatprep.subr.mxu0 0.0
    %320 = vmatpush1.msra.mxu0 0.0
    %321 = vmatprep.subr.mxu0 0.0
    %322 = vmatpush1.msra.mxu0 0.0
    %323 = vmatprep.subr.mxu0 0.0
    %324 = vmatpush1.msra.mxu0 0.0
    %325 = vmatprep.subr.mxu0 0.0
    %326 = vmatpush1.msra.mxu0 0.0
    %327 = vmatprep.subr.mxu0 0.0
    %328 = vmatpush1.msra.mxu0 0.0
    %329 = vmatprep.mubr.f32.mxu0 0.0
    %330 = vmatmul.mubr.f32.gmra.mrb[0].mxu0 %v236
    %v331 = vpop.f32.mrb[0].mxu0
    %v332 = vadd.f32 %v234, %v331
    %v333 = vpop.f32.mrb[0].mxu0
    %334 = vmatprep.mubr.f32.mxu0 0.0
    %335 = vmatmul.mubr.f32.gmra.mrb[0].mxu0 %v239
    %v336 = vpop.f32.mrb[0].mxu0
    %v337 = vadd.f32 %v234, %v336
    %v338 = vpop.f32.mrb[0].mxu0
    %339 = vmatprep.mubr.f32.mxu0 0.0
    %340 = vmatmul.mubr.f32.gmra.mrb[0].mxu0 %v242
    %v341 = vpop.f32.mrb[0].mxu0
    %v342 = vadd.f32 %v234, %v341
    %v343 = vpop.f32.mrb[0].mxu0
    %344 = vmatprep.mubr.f32.mxu0 0.0
    %345 = vmatmul.mubr.f32.gmra.mrb[0].mxu0 %v245
    %v346 = vpop.f32.mrb[0].mxu0
    %v347 = vadd.f32 %v234, %v346
    %v348 = vpop.f32.mrb[0].mxu0
    %349 = vmatprep.mubr.f32.mxu0 0.0
    %350 = vmatmul.mubr.f32.gmra.mrb[0].mxu0 %v248
    %v351 = vpop.f32.mrb[0].mxu0
    %v352 = vadd.f32 %v234, %v351
    %v353 = vpop.f32.mrb[0].mxu0
    %354 = vmatprep.mubr.f32.mxu0 0.0
    %355 = vmatmul.mubr.f32.gmra.mrb[0].mxu0 %v251
    %v356 = vpop.f32.mrb[0].mxu0
    %v357 = vadd.f32 %v234, %v356
    %v358 = vpop.f32.mrb[0].mxu0
    %359 = vmatprep.mubr.f32.mxu0 0.0
    %360 = vmatmul.mubr.f32.gmra.mrb[0].mxu0 %v254
    %v361 = vpop.f32.mrb[0].mxu0
    %v362 = vadd.f32 %v234, %v361
    %v363 = vpop.f32.mrb[0].mxu0
    %364 = vmatprep.mubr.f32.mxu0 0.0
    %365 = vmatmul.mubr.f32.gmra.mrb[0].mxu0 %v257
    %v366 = vpop.f32.mrb[0].mxu0
    %v367 = vadd.f32 %v234, %v366
    %v368 = vpop.f32.mrb[0].mxu0
    %369 = vmatprep.mubr.f32.mxu0 0.0
    %370 = vmatmul.mubr.f32.gmra.mrb[0].mxu0 %v260
    %v371 = vpop.f32.mrb[0].mxu0
    %v372 = vadd.f32 %v234, %v371
    %v373 = vpop.f32.mrb[0].mxu0
    %374 = vmatprep.mubr.f32.mxu0 0.0
    %375 = vmatmul.mubr.f32.gmra.mrb[0].mxu0 %v263
    %v376 = vpop.f32.mrb[0].mxu0
    %v377 = vadd.f32 %v234, %v376
    %v378 = vpop.f32.mrb[0].mxu0
    %379 = vdwg.mxu0
    %v380 = vmax.f32 %v332, 0.0
    %v381 = vmax.f32 %v337, 0.0
    %v382 = vmax.f32 %v342, 0.0
    %v383 = vmax.f32 %v347, 0.0
    %v384 = vmax.f32 %v352, 0.0
    %v385 = vmax.f32 %v357, 0.0
    %v386 = vmax.f32 %v362, 0.0
    %v387 = vmax.f32 %v367, 0.0
    %v388 = vmax.f32 %v372, 0.0
    %v389 = vmax.f32 %v377, 0.0
    %s390 = scalar_lea.vmem [#allocation3], 192
    %v391 = vld [vmem:[%s390] sm:$0xff]
    %v392 = vld [vmem:[%s390 + $0x8] sm:$0xff]
    %v393 = vld [vmem:[%s390 + $0x10] sm:$0xff]
    %v394 = vld [vmem:[%s390 + $0x18] sm:$0xff]
    %v395 = vld [vmem:[%s390 + $0x20] sm:$0xff]
    %v396 = vld [vmem:[%s390 + $0x28] sm:$0xff]
    %v397 = vld [vmem:[%s390 + $0x30] sm:$0xff]
    %v398 = vld [vmem:[%s390 + $0x38] sm:$0xff]
    %v399 = vld [vmem:[%s2 + $0x3] sm:$0x1]
    %v400 = vlaneseq
    %v401 = vshrl.u32 %v400, 7
    %v402 = vsub.s32 0, %v401
    %v403 = vrot.slane %v399, %v402
    %v405 = vsel %vm134, %v380, 0
    %v408 = vsel %vm134, %v381, 0
    %v411 = vsel %vm134, %v382, 0
    %v414 = vsel %vm134, %v383, 0
    %v417 = vsel %vm134, %v384, 0
    %v420 = vsel %vm134, %v385, 0
    %v423 = vsel %vm134, %v386, 0
    %v426 = vsel %vm134, %v387, 0
    %v429 = vsel %vm134, %v388, 0
    %v432 = vsel %vm134, %v389, 0
    %434 = vmatprep.subr.mxu0 0.0
    %435 = vmatpush1.msra.mxu0 %v391
    %436 = vmatprep.subr.mxu0 0.0
    %437 = vmatpush1.msra.mxu0 %v392
    %438 = vmatprep.subr.mxu0 0.0
    %439 = vmatpush1.msra.mxu0 %v393
    %440 = vmatprep.subr.mxu0 0.0
    %441 = vmatpush1.msra.mxu0 %v394
    %442 = vmatprep.subr.mxu0 0.0
    %443 = vmatpush1.msra.mxu0 %v395
    %444 = vmatprep.subr.mxu0 0.0
    %445 = vmatpush1.msra.mxu0 %v396
    %446 = vmatprep.subr.mxu0 0.0
    %447 = vmatpush1.msra.mxu0 %v397
    %448 = vmatprep.subr.mxu0 0.0
    %449 = vmatpush1.msra.mxu0 %v398
    %450 = vmatprep.subr.mxu0 0.0
    %451 = vmatpush1.msra.mxu0 0.0
    %452 = vmatprep.subr.mxu0 0.0
    %453 = vmatpush1.msra.mxu0 0.0
    %454 = vmatprep.subr.mxu0 0.0
    %455 = vmatpush1.msra.mxu0 0.0
    %456 = vmatprep.subr.mxu0 0.0
    %457 = vmatpush1.msra.mxu0 0.0
    %458 = vmatprep.subr.mxu0 0.0
    %459 = vmatpush1.msra.mxu0 0.0
    %460 = vmatprep.subr.mxu0 0.0
    %461 = vmatpush1.msra.mxu0 0.0
    %462 = vmatprep.subr.mxu0 0.0
    %463 = vmatpush1.msra.mxu0 0.0
    %464 = vmatprep.subr.mxu0 0.0
    %465 = vmatpush1.msra.mxu0 0.0
    %466 = vmatprep.subr.mxu0 0.0
    %467 = vmatpush1.msra.mxu0 0.0
    %468 = vmatprep.subr.mxu0 0.0
    %469 = vmatpush1.msra.mxu0 0.0
    %470 = vmatprep.subr.mxu0 0.0
    %471 = vmatpush1.msra.mxu0 0.0
    %472 = vmatprep.subr.mxu0 0.0
    %473 = vmatpush1.msra.mxu0 0.0
    %474 = vmatprep.subr.mxu0 0.0
    %475 = vmatpush1.msra.mxu0 0.0
    %476 = vmatprep.subr.mxu0 0.0
    %477 = vmatpush1.msra.mxu0 0.0
    %478 = vmatprep.subr.mxu0 0.0
    %479 = vmatpush1.msra.mxu0 0.0
    %480 = vmatprep.subr.mxu0 0.0
    %481 = vmatpush1.msra.mxu0 0.0
    %482 = vmatprep.subr.mxu0 0.0
    %483 = vmatpush1.msra.mxu0 0.0
    %484 = vmatprep.subr.mxu0 0.0
    %485 = vmatpush1.msra.mxu0 0.0
    %486 = vmatprep.subr.mxu0 0.0
    %487 = vmatpush1.msra.mxu0 0.0
    %488 = vmatprep.subr.mxu0 0.0
    %489 = vmatpush1.msra.mxu0 0.0
    %490 = vmatprep.subr.mxu0 0.0
    %491 = vmatpush1.msra.mxu0 0.0
    %492 = vmatprep.subr.mxu0 0.0
    %493 = vmatpush1.msra.mxu0 0.0
    %494 = vmatprep.subr.mxu0 0.0
    %495 = vmatpush1.msra.mxu0 0.0
    %496 = vmatprep.subr.mxu0 0.0
    %497 = vmatpush1.msra.mxu0 0.0
    %498 = vmatprep.mubr.f32.mxu0 0.0
    %499 = vmatmul.mubr.f32.gmra.mrb[0].mxu0 %v405
    %v500 = vpop.f32.mrb[0].mxu0
    %v501 = vadd.f32 %v403, %v500
    %v502 = vpop.f32.mrb[0].mxu0
    %503 = vmatprep.mubr.f32.mxu0 0.0
    %504 = vmatmul.mubr.f32.gmra.mrb[0].mxu0 %v408
    %v505 = vpop.f32.mrb[0].mxu0
    %v506 = vadd.f32 %v403, %v505
    %v507 = vpop.f32.mrb[0].mxu0
    %508 = vmatprep.mubr.f32.mxu0 0.0
    %509 = vmatmul.mubr.f32.gmra.mrb[0].mxu0 %v411
    %v510 = vpop.f32.mrb[0].mxu0
    %v511 = vadd.f32 %v403, %v510
    %v512 = vpop.f32.mrb[0].mxu0
    %513 = vmatprep.mubr.f32.mxu0 0.0
    %514 = vmatmul.mubr.f32.gmra.mrb[0].mxu0 %v414
    %v515 = vpop.f32.mrb[0].mxu0
    %v516 = vadd.f32 %v403, %v515
    %v517 = vpop.f32.mrb[0].mxu0
    %518 = vmatprep.mubr.f32.mxu0 0.0
    %519 = vmatmul.mubr.f32.gmra.mrb[0].mxu0 %v417
    %v520 = vpop.f32.mrb[0].mxu0
    %v521 = vadd.f32 %v403, %v520
    %v522 = vpop.f32.mrb[0].mxu0
    %523 = vmatprep.mubr.f32.mxu0 0.0
    %524 = vmatmul.mubr.f32.gmra.mrb[0].mxu0 %v420
    %v525 = vpop.f32.mrb[0].mxu0
    %v526 = vadd.f32 %v403, %v525
    %v527 = vpop.f32.mrb[0].mxu0
    %528 = vmatprep.mubr.f32.mxu0 0.0
    %529 = vmatmul.mubr.f32.gmra.mrb[0].mxu0 %v423
    %v530 = vpop.f32.mrb[0].mxu0
    %v531 = vadd.f32 %v403, %v530
    %v532 = vpop.f32.mrb[0].mxu0
    %533 = vmatprep.mubr.f32.mxu0 0.0
    %534 = vmatmul.mubr.f32.gmra.mrb[0].mxu0 %v426
    %v535 = vpop.f32.mrb[0].mxu0
    %v536 = vadd.f32 %v403, %v535
    %v537 = vpop.f32.mrb[0].mxu0
    %538 = vmatprep.mubr.f32.mxu0 0.0
    %539 = vmatmul.mubr.f32.gmra.mrb[0].mxu0 %v429
    %v540 = vpop.f32.mrb[0].mxu0
    %v541 = vadd.f32 %v403, %v540
    %v542 = vpop.f32.mrb[0].mxu0
    %543 = vmatprep.mubr.f32.mxu0 0.0
    %544 = vmatmul.mubr.f32.gmra.mrb[0].mxu0 %v432
    %v545 = vpop.f32.mrb[0].mxu0
    %v546 = vadd.f32 %v403, %v545
    %v547 = vpop.f32.mrb[0].mxu0
    %548 = vdwg.mxu0
    %v549 = vmax.f32 %v501, 0.0
    %v550 = vmax.f32 %v506, 0.0
    %v551 = vmax.f32 %v511, 0.0
    %v552 = vmax.f32 %v516, 0.0
    %v553 = vmax.f32 %v521, 0.0
    %v554 = vmax.f32 %v526, 0.0
    %v555 = vmax.f32 %v531, 0.0
    %v556 = vmax.f32 %v536, 0.0
    %v557 = vmax.f32 %v541, 0.0
    %v558 = vmax.f32 %v546, 0.0
    %559 = vst.msk [vmem:[#allocation2] sm:$0xff] %vm134, %v216
    %560 = vst.msk [vmem:[#allocation2 + $0x8] sm:$0xff] %vm134, %v217
    %561 = vst.msk [vmem:[#allocation2 + $0x10] sm:$0xff] %vm134, %v549
    %562 = vst.msk [vmem:[#allocation2 + $0x18] sm:$0xff] %vm134, %v550
    %563 = vst.msk [vmem:[#allocation2 + $0x20] sm:$0xff] %vm134, %v551
    %564 = vst.msk [vmem:[#allocation2 + $0x28] sm:$0xff] %vm134, %v552
    %565 = vst.msk [vmem:[#allocation2 + $0x30] sm:$0xff] %vm134, %v553
    %566 = vst.msk [vmem:[#allocation2 + $0x38] sm:$0xff] %vm134, %v554
    %567 = vst.msk [vmem:[#allocation2 + $0x40] sm:$0xff] %vm134, %v555
    %568 = vst.msk [vmem:[#allocation2 + $0x48] sm:$0xff] %vm134, %v556
    %569 = vst.msk [vmem:[#allocation2 + $0x50] sm:$0xff] %vm134, %v557
    %570 = vst.msk [vmem:[#allocation2 + $0x58] sm:$0xff] %vm134, %v558
    %v571 = vld [vmem:[#allocation2] sm:$0xff]
    %v572 = vld [vmem:[#allocation2 + $0x8] sm:$0xff]
    %v573 = vld [vmem:[#allocation2 + $0x10] sm:$0xff]
    %v574 = vld [vmem:[#allocation2 + $0x18] sm:$0xff]
    %v575 = vld [vmem:[#allocation2 + $0x20] sm:$0xff]
    %v576 = vld [vmem:[#allocation2 + $0x28] sm:$0xff]
    %v577 = vld [vmem:[#allocation2 + $0x30] sm:$0xff]
    %v578 = vld [vmem:[#allocation2 + $0x38] sm:$0xff]
    %v579 = vld [vmem:[#allocation2 + $0x40] sm:$0xff]
    %v580 = vld [vmem:[#allocation2 + $0x48] sm:$0xff]
    %v581 = vld [vmem:[#allocation2 + $0x50] sm:$0xff]
    %v582 = vld [vmem:[#allocation2 + $0x58] sm:$0xff]
    %v583 = vsel %vm134, %v571, 0.0
    %v584 = vsel %vm134, %v573, 0.0
    %v585 = vadd.f32 %v583, %v584
    %v586 = vsel %vm134, %v575, 0.0
    %v587 = vadd.f32 %v585, %v586
    %v588 = vsel %vm134, %v577, 0.0
    %v589 = vadd.f32 %v587, %v588
    %v590 = vsel %vm134, %v579, 0.0
    %v591 = vadd.f32 %v589, %v590
    %v592 = vsel %vm134, %v581, 0.0
    %v593 = vadd.f32 %v591, %v592
    %v594 = vsel %vm134, %v572, 0.0
    %v595 = vsel %vm134, %v574, 0.0
    %v596 = vadd.f32 %v594, %v595
    %v597 = vsel %vm134, %v576, 0.0
    %v598 = vadd.f32 %v596, %v597
    %v599 = vsel %vm134, %v578, 0.0
    %v600 = vadd.f32 %v598, %v599
    %v601 = vsel %vm134, %v580, 0.0
    %v602 = vadd.f32 %v600, %v601
    %v603 = vsel %vm134, %v582, 0.0
    %v604 = vadd.f32 %v602, %v603
    %v605 = vsub.f32 %v593, %v571
    %v606 = vsub.f32 %v604, %v572
    %v607 = vsub.f32 %v593, %v573
    %v608 = vsub.f32 %v604, %v574
    %v609 = vsub.f32 %v593, %v575
    %v610 = vsub.f32 %v604, %v576
    %v611 = vsub.f32 %v593, %v577
    %v612 = vsub.f32 %v604, %v578
    %v613 = vsub.f32 %v593, %v579
    %v614 = vsub.f32 %v604, %v580
    %v615 = vsub.f32 %v593, %v581
    %v616 = vsub.f32 %v604, %v582
    %s617 = scalar_lea.vmem [#allocation3], 256
    %v618 = vld [vmem:[%s617] sm:$0xff]
    %v619 = vld [vmem:[%s617 + $0x8] sm:$0xff]
    %v620 = vld [vmem:[%s617 + $0x10] sm:$0xff]
    %v621 = vld [vmem:[%s617 + $0x18] sm:$0xff]
    %v622 = vld [vmem:[%s617 + $0x20] sm:$0xff]
    %v623 = vld [vmem:[%s617 + $0x28] sm:$0xff]
    %v624 = vld [vmem:[%s617 + $0x30] sm:$0xff]
    %v625 = vld [vmem:[%s617 + $0x38] sm:$0xff]
    %s626 = scalar_lea.vmem [#allocation3], 320
    %v627 = vld [vmem:[%s626] sm:$0xff]
    %v628 = vld [vmem:[%s626 + $0x8] sm:$0xff]
    %v629 = vld [vmem:[%s626 + $0x10] sm:$0xff]
    %v630 = vld [vmem:[%s626 + $0x18] sm:$0xff]
    %v631 = vld [vmem:[%s626 + $0x20] sm:$0xff]
    %v632 = vld [vmem:[%s626 + $0x28] sm:$0xff]
    %v633 = vld [vmem:[%s626 + $0x30] sm:$0xff]
    %v634 = vld [vmem:[%s626 + $0x38] sm:$0xff]
    %v636 = vsel %vm134, %v571, 0
    %v639 = vsel %vm134, %v572, 0
    %v642 = vsel %vm134, %v573, 0
    %v645 = vsel %vm134, %v574, 0
    %v648 = vsel %vm134, %v575, 0
    %v651 = vsel %vm134, %v576, 0
    %v654 = vsel %vm134, %v577, 0
    %v657 = vsel %vm134, %v578, 0
    %v660 = vsel %vm134, %v579, 0
    %v663 = vsel %vm134, %v580, 0
    %v666 = vsel %vm134, %v581, 0
    %v669 = vsel %vm134, %v582, 0
    %671 = vmatprep.subr.mxu0 0.0
    %672 = vmatpush1.msra.mxu0 %v627
    %673 = vmatprep.subr.mxu0 0.0
    %674 = vmatpush1.msra.mxu0 %v628
    %675 = vmatprep.subr.mxu0 0.0
    %676 = vmatpush1.msra.mxu0 %v629
    %677 = vmatprep.subr.mxu0 0.0
    %678 = vmatpush1.msra.mxu0 %v630
    %679 = vmatprep.subr.mxu0 0.0
    %680 = vmatpush1.msra.mxu0 %v631
    %681 = vmatprep.subr.mxu0 0.0
    %682 = vmatpush1.msra.mxu0 %v632
    %683 = vmatprep.subr.mxu0 0.0
    %684 = vmatpush1.msra.mxu0 %v633
    %685 = vmatprep.subr.mxu0 0.0
    %686 = vmatpush1.msra.mxu0 %v634
    %687 = vmatprep.subr.mxu0 0.0
    %688 = vmatpush1.msra.mxu0 0.0
    %689 = vmatprep.subr.mxu0 0.0
    %690 = vmatpush1.msra.mxu0 0.0
    %691 = vmatprep.subr.mxu0 0.0
    %692 = vmatpush1.msra.mxu0 0.0
    %693 = vmatprep.subr.mxu0 0.0
    %694 = vmatpush1.msra.mxu0 0.0
    %695 = vmatprep.subr.mxu0 0.0
    %696 = vmatpush1.msra.mxu0 0.0
    %697 = vmatprep.subr.mxu0 0.0
    %698 = vmatpush1.msra.mxu0 0.0
    %699 = vmatprep.subr.mxu0 0.0
    %700 = vmatpush1.msra.mxu0 0.0
    %701 = vmatprep.subr.mxu0 0.0
    %702 = vmatpush1.msra.mxu0 0.0
    %703 = vmatprep.subr.mxu0 0.0
    %704 = vmatpush1.msra.mxu0 0.0
    %705 = vmatprep.subr.mxu0 0.0
    %706 = vmatpush1.msra.mxu0 0.0
    %707 = vmatprep.subr.mxu0 0.0
    %708 = vmatpush1.msra.mxu0 0.0
    %709 = vmatprep.subr.mxu0 0.0
    %710 = vmatpush1.msra.mxu0 0.0
    %711 = vmatprep.subr.mxu0 0.0
    %712 = vmatpush1.msra.mxu0 0.0
    %713 = vmatprep.subr.mxu0 0.0
    %714 = vmatpush1.msra.mxu0 0.0
    %715 = vmatprep.subr.mxu0 0.0
    %716 = vmatpush1.msra.mxu0 0.0
    %717 = vmatprep.subr.mxu0 0.0
    %718 = vmatpush1.msra.mxu0 0.0
    %719 = vmatprep.subr.mxu0 0.0
    %720 = vmatpush1.msra.mxu0 0.0
    %721 = vmatprep.subr.mxu0 0.0
    %722 = vmatpush1.msra.mxu0 0.0
    %723 = vmatprep.subr.mxu0 0.0
    %724 = vmatpush1.msra.mxu0 0.0
    %725 = vmatprep.subr.mxu0 0.0
    %726 = vmatpush1.msra.mxu0 0.0
    %727 = vmatprep.subr.mxu0 0.0
    %728 = vmatpush1.msra.mxu0 0.0
    %729 = vmatprep.subr.mxu0 0.0
    %730 = vmatpush1.msra.mxu0 0.0
    %731 = vmatprep.subr.mxu0 0.0
    %732 = vmatpush1.msra.mxu0 0.0
    %733 = vmatprep.subr.mxu0 0.0
    %734 = vmatpush1.msra.mxu0 0.0
    %735 = vmatprep.mubr.f32.mxu0 0.0
    %736 = vmatmul.mubr.f32.gmra.mrb[0].mxu0 %v636
    %v737 = vpop.f32.mrb[0].mxu0
    %v738 = vadd.f32 0.0, %v737
    %v739 = vpop.f32.mrb[0].mxu0
    %740 = vmatprep.mubr.f32.mxu0 0.0
    %741 = vmatmul.mubr.f32.gmra.mrb[0].mxu0 %v639
    %v742 = vpop.f32.mrb[0].mxu0
    %v743 = vadd.f32 0.0, %v742
    %v744 = vpop.f32.mrb[0].mxu0
    %745 = vmatprep.mubr.f32.mxu0 0.0
    %746 = vmatmul.mubr.f32.gmra.mrb[0].mxu0 %v642
    %v747 = vpop.f32.mrb[0].mxu0
    %v748 = vadd.f32 0.0, %v747
    %v749 = vpop.f32.mrb[0].mxu0
    %750 = vmatprep.mubr.f32.mxu0 0.0
    %751 = vmatmul.mubr.f32.gmra.mrb[0].mxu0 %v645
    %v752 = vpop.f32.mrb[0].mxu0
    %v753 = vadd.f32 0.0, %v752
    %v754 = vpop.f32.mrb[0].mxu0
    %755 = vmatprep.mubr.f32.mxu0 0.0
    %756 = vmatmul.mubr.f32.gmra.mrb[0].mxu0 %v648
    %v757 = vpop.f32.mrb[0].mxu0
    %v758 = vadd.f32 0.0, %v757
    %v759 = vpop.f32.mrb[0].mxu0
    %760 = vmatprep.mubr.f32.mxu0 0.0
    %761 = vmatmul.mubr.f32.gmra.mrb[0].mxu0 %v651
    %v762 = vpop.f32.mrb[0].mxu0
    %v763 = vadd.f32 0.0, %v762
    %v764 = vpop.f32.mrb[0].mxu0
    %765 = vmatprep.mubr.f32.mxu0 0.0
    %766 = vmatmul.mubr.f32.gmra.mrb[0].mxu0 %v654
    %v767 = vpop.f32.mrb[0].mxu0
    %v768 = vadd.f32 0.0, %v767
    %v769 = vpop.f32.mrb[0].mxu0
    %770 = vmatprep.mubr.f32.mxu0 0.0
    %771 = vmatmul.mubr.f32.gmra.mrb[0].mxu0 %v657
    %v772 = vpop.f32.mrb[0].mxu0
    %v773 = vadd.f32 0.0, %v772
    %v774 = vpop.f32.mrb[0].mxu0
    %775 = vmatprep.mubr.f32.mxu0 0.0
    %776 = vmatmul.mubr.f32.gmra.mrb[0].mxu0 %v660
    %v777 = vpop.f32.mrb[0].mxu0
    %v778 = vadd.f32 0.0, %v777
    %v779 = vpop.f32.mrb[0].mxu0
    %780 = vmatprep.mubr.f32.mxu0 0.0
    %781 = vmatmul.mubr.f32.gmra.mrb[0].mxu0 %v663
    %v782 = vpop.f32.mrb[0].mxu0
    %v783 = vadd.f32 0.0, %v782
    %v784 = vpop.f32.mrb[0].mxu0
    %785 = vmatprep.mubr.f32.mxu0 0.0
    %786 = vmatmul.mubr.f32.gmra.mrb[0].mxu0 %v666
    %v787 = vpop.f32.mrb[0].mxu0
    %v788 = vadd.f32 0.0, %v787
    %v789 = vpop.f32.mrb[0].mxu0
    %790 = vmatprep.mubr.f32.mxu0 0.0
    %791 = vmatmul.mubr.f32.gmra.mrb[0].mxu0 %v669
    %v792 = vpop.f32.mrb[0].mxu0
    %v793 = vadd.f32 0.0, %v792
    %v794 = vpop.f32.mrb[0].mxu0
    %795 = vdwg.mxu0
    %v797 = vsel %vm134, %v605, 0
    %v800 = vsel %vm134, %v606, 0
    %v803 = vsel %vm134, %v607, 0
    %v806 = vsel %vm134, %v608, 0
    %v809 = vsel %vm134, %v609, 0
    %v812 = vsel %vm134, %v610, 0
    %v815 = vsel %vm134, %v611, 0
    %v818 = vsel %vm134, %v612, 0
    %v821 = vsel %vm134, %v613, 0
    %v824 = vsel %vm134, %v614, 0
    %v827 = vsel %vm134, %v615, 0
    %v830 = vsel %vm134, %v616, 0
    %832 = vmatprep.subr.mxu0 0.0
    %833 = vmatpush1.msra.mxu0 %v618
    %834 = vmatprep.subr.mxu0 0.0
    %835 = vmatpush1.msra.mxu0 %v619
    %836 = vmatprep.subr.mxu0 0.0
    %837 = vmatpush1.msra.mxu0 %v620
    %838 = vmatprep.subr.mxu0 0.0
    %839 = vmatpush1.msra.mxu0 %v621
    %840 = vmatprep.subr.mxu0 0.0
    %841 = vmatpush1.msra.mxu0 %v622
    %842 = vmatprep.subr.mxu0 0.0
    %843 = vmatpush1.msra.mxu0 %v623
    %844 = vmatprep.subr.mxu0 0.0
    %845 = vmatpush1.msra.mxu0 %v624
    %846 = vmatprep.subr.mxu0 0.0
    %847 = vmatpush1.msra.mxu0 %v625
    %848 = vmatprep.subr.mxu0 0.0
    %849 = vmatpush1.msra.mxu0 0.0
    %850 = vmatprep.subr.mxu0 0.0
    %851 = vmatpush1.msra.mxu0 0.0
    %852 = vmatprep.subr.mxu0 0.0
    %853 = vmatpush1.msra.mxu0 0.0
    %854 = vmatprep.subr.mxu0 0.0
    %855 = vmatpush1.msra.mxu0 0.0
    %856 = vmatprep.subr.mxu0 0.0
    %857 = vmatpush1.msra.mxu0 0.0
    %858 = vmatprep.subr.mxu0 0.0
    %859 = vmatpush1.msra.mxu0 0.0
    %860 = vmatprep.subr.mxu0 0.0
    %861 = vmatpush1.msra.mxu0 0.0
    %862 = vmatprep.subr.mxu0 0.0
    %863 = vmatpush1.msra.mxu0 0.0
    %864 = vmatprep.subr.mxu0 0.0
    %865 = vmatpush1.msra.mxu0 0.0
    %866 = vmatprep.subr.mxu0 0.0
    %867 = vmatpush1.msra.mxu0 0.0
    %868 = vmatprep.subr.mxu0 0.0
    %869 = vmatpush1.msra.mxu0 0.0
    %870 = vmatprep.subr.mxu0 0.0
    %871 = vmatpush1.msra.mxu0 0.0
    %872 = vmatprep.subr.mxu0 0.0
    %873 = vmatpush1.msra.mxu0 0.0
    %874 = vmatprep.subr.mxu0 0.0
    %875 = vmatpush1.msra.mxu0 0.0
    %876 = vmatprep.subr.mxu0 0.0
    %877 = vmatpush1.msra.mxu0 0.0
    %878 = vmatprep.subr.mxu0 0.0
    %879 = vmatpush1.msra.mxu0 0.0
    %880 = vmatprep.subr.mxu0 0.0
    %881 = vmatpush1.msra.mxu0 0.0
    %882 = vmatprep.subr.mxu0 0.0
    %883 = vmatpush1.msra.mxu0 0.0
    %884 = vmatprep.subr.mxu0 0.0
    %885 = vmatpush1.msra.mxu0 0.0
    %886 = vmatprep.subr.mxu0 0.0
    %887 = vmatpush1.msra.mxu0 0.0
    %888 = vmatprep.subr.mxu0 0.0
    %889 = vmatpush1.msra.mxu0 0.0
    %890 = vmatprep.subr.mxu0 0.0
    %891 = vmatpush1.msra.mxu0 0.0
    %892 = vmatprep.subr.mxu0 0.0
    %893 = vmatpush1.msra.mxu0 0.0
    %894 = vmatprep.subr.mxu0 0.0
    %895 = vmatpush1.msra.mxu0 0.0
    %896 = vmatprep.mubr.f32.mxu0 0.0
    %897 = vmatmul.mubr.f32.gmra.mrb[0].mxu0 %v797
    %v898 = vpop.f32.mrb[0].mxu0
    %v899 = vadd.f32 %v738, %v898
    %v900 = vpop.f32.mrb[0].mxu0
    %901 = vmatprep.mubr.f32.mxu0 0.0
    %902 = vmatmul.mubr.f32.gmra.mrb[0].mxu0 %v800
    %v903 = vpop.f32.mrb[0].mxu0
    %v904 = vadd.f32 %v743, %v903
    %v905 = vpop.f32.mrb[0].mxu0
    %906 = vmatprep.mubr.f32.mxu0 0.0
    %907 = vmatmul.mubr.f32.gmra.mrb[0].mxu0 %v803
    %v908 = vpop.f32.mrb[0].mxu0
    %v909 = vadd.f32 %v748, %v908
    %v910 = vpop.f32.mrb[0].mxu0
    %911 = vmatprep.mubr.f32.mxu0 0.0
    %912 = vmatmul.mubr.f32.gmra.mrb[0].mxu0 %v806
    %v913 = vpop.f32.mrb[0].mxu0
    %v914 = vadd.f32 %v753, %v913
    %v915 = vpop.f32.mrb[0].mxu0
    %916 = vmatprep.mubr.f32.mxu0 0.0
    %917 = vmatmul.mubr.f32.gmra.mrb[0].mxu0 %v809
    %v918 = vpop.f32.mrb[0].mxu0
    %v919 = vadd.f32 %v758, %v918
    %v920 = vpop.f32.mrb[0].mxu0
    %921 = vmatprep.mubr.f32.mxu0 0.0
    %922 = vmatmul.mubr.f32.gmra.mrb[0].mxu0 %v812
    %v923 = vpop.f32.mrb[0].mxu0
    %v924 = vadd.f32 %v763, %v923
    %v925 = vpop.f32.mrb[0].mxu0
    %926 = vmatprep.mubr.f32.mxu0 0.0
    %927 = vmatmul.mubr.f32.gmra.mrb[0].mxu0 %v815
    %v928 = vpop.f32.mrb[0].mxu0
    %v929 = vadd.f32 %v768, %v928
    %v930 = vpop.f32.mrb[0].mxu0
    %931 = vmatprep.mubr.f32.mxu0 0.0
    %932 = vmatmul.mubr.f32.gmra.mrb[0].mxu0 %v818
    %v933 = vpop.f32.mrb[0].mxu0
    %v934 = vadd.f32 %v773, %v933
    %v935 = vpop.f32.mrb[0].mxu0
    %936 = vmatprep.mubr.f32.mxu0 0.0
    %937 = vmatmul.mubr.f32.gmra.mrb[0].mxu0 %v821
    %v938 = vpop.f32.mrb[0].mxu0
    %v939 = vadd.f32 %v778, %v938
    %v940 = vpop.f32.mrb[0].mxu0
    %941 = vmatprep.mubr.f32.mxu0 0.0
    %942 = vmatmul.mubr.f32.gmra.mrb[0].mxu0 %v824
    %v943 = vpop.f32.mrb[0].mxu0
    %v944 = vadd.f32 %v783, %v943
    %v945 = vpop.f32.mrb[0].mxu0
    %946 = vmatprep.mubr.f32.mxu0 0.0
    %947 = vmatmul.mubr.f32.gmra.mrb[0].mxu0 %v827
    %v948 = vpop.f32.mrb[0].mxu0
    %v949 = vadd.f32 %v788, %v948
    %v950 = vpop.f32.mrb[0].mxu0
    %951 = vmatprep.mubr.f32.mxu0 0.0
    %952 = vmatmul.mubr.f32.gmra.mrb[0].mxu0 %v830
    %v953 = vpop.f32.mrb[0].mxu0
    %v954 = vadd.f32 %v793, %v953
    %v955 = vpop.f32.mrb[0].mxu0
    %956 = vdwg.mxu0
    %v957 = vld [vmem:[%s2 + $0x4] sm:$0x1]
    %v958 = vlaneseq
    %v959 = vshrl.u32 %v958, 7
    %v960 = vsub.s32 0, %v959
    %v961 = vrot.slane %v957, %v960
    %v962 = vadd.f32 %v899, %v961
    %v963 = vadd.f32 %v904, %v961
    %v964 = vadd.f32 %v909, %v961
    %v965 = vadd.f32 %v914, %v961
    %v966 = vadd.f32 %v919, %v961
    %v967 = vadd.f32 %v924, %v961
    %v968 = vadd.f32 %v929, %v961
    %v969 = vadd.f32 %v934, %v961
    %v970 = vadd.f32 %v939, %v961
    %v971 = vadd.f32 %v944, %v961
    %v972 = vadd.f32 %v949, %v961
    %v973 = vadd.f32 %v954, %v961
    %v974 = vmax.f32 %v962, 0.0
    %v975 = vmax.f32 %v963, 0.0
    %v976 = vmax.f32 %v964, 0.0
    %v977 = vmax.f32 %v965, 0.0
    %v978 = vmax.f32 %v966, 0.0
    %v979 = vmax.f32 %v967, 0.0
    %v980 = vmax.f32 %v968, 0.0
    %v981 = vmax.f32 %v969, 0.0
    %v982 = vmax.f32 %v970, 0.0
    %v983 = vmax.f32 %v971, 0.0
    %v984 = vmax.f32 %v972, 0.0
    %v985 = vmax.f32 %v973, 0.0
    %v986 = vsel %vm134, %v974, 0.0
    %v987 = vsel %vm134, %v976, 0.0
    %v988 = vadd.f32 %v986, %v987
    %v989 = vsel %vm134, %v978, 0.0
    %v990 = vadd.f32 %v988, %v989
    %v991 = vsel %vm134, %v980, 0.0
    %v992 = vadd.f32 %v990, %v991
    %v993 = vsel %vm134, %v982, 0.0
    %v994 = vadd.f32 %v992, %v993
    %v995 = vsel %vm134, %v984, 0.0
    %v996 = vadd.f32 %v994, %v995
    %v997 = vsel %vm134, %v975, 0.0
    %v998 = vsel %vm134, %v977, 0.0
    %v999 = vadd.f32 %v997, %v998
    %v1000 = vsel %vm134, %v979, 0.0
    %v1001 = vadd.f32 %v999, %v1000
    %v1002 = vsel %vm134, %v981, 0.0
    %v1003 = vadd.f32 %v1001, %v1002
    %v1004 = vsel %vm134, %v983, 0.0
    %v1005 = vadd.f32 %v1003, %v1004
    %v1006 = vsel %vm134, %v985, 0.0
    %v1007 = vadd.f32 %v1005, %v1006
    %v1008 = vsub.f32 %v996, %v974
    %v1009 = vsub.f32 %v1007, %v975
    %v1010 = vsub.f32 %v996, %v976
    %v1011 = vsub.f32 %v1007, %v977
    %v1012 = vsub.f32 %v996, %v978
    %v1013 = vsub.f32 %v1007, %v979
    %v1014 = vsub.f32 %v996, %v980
    %v1015 = vsub.f32 %v1007, %v981
    %v1016 = vsub.f32 %v996, %v982
    %v1017 = vsub.f32 %v1007, %v983
    %v1018 = vsub.f32 %v996, %v984
    %v1019 = vsub.f32 %v1007, %v985
    %s1020 = scalar_lea.vmem [#allocation3], 384
    %v1021 = vld [vmem:[%s1020] sm:$0xff]
    %v1022 = vld [vmem:[%s1020 + $0x8] sm:$0xff]
    %v1023 = vld [vmem:[%s1020 + $0x10] sm:$0xff]
    %v1024 = vld [vmem:[%s1020 + $0x18] sm:$0xff]
    %v1025 = vld [vmem:[%s1020 + $0x20] sm:$0xff]
    %v1026 = vld [vmem:[%s1020 + $0x28] sm:$0xff]
    %v1027 = vld [vmem:[%s1020 + $0x30] sm:$0xff]
    %v1028 = vld [vmem:[%s1020 + $0x38] sm:$0xff]
    %s1029 = scalar_lea.vmem [#allocation3], 448
    %v1030 = vld [vmem:[%s1029] sm:$0xff]
    %v1031 = vld [vmem:[%s1029 + $0x8] sm:$0xff]
    %v1032 = vld [vmem:[%s1029 + $0x10] sm:$0xff]
    %v1033 = vld [vmem:[%s1029 + $0x18] sm:$0xff]
    %v1034 = vld [vmem:[%s1029 + $0x20] sm:$0xff]
    %v1035 = vld [vmem:[%s1029 + $0x28] sm:$0xff]
    %v1036 = vld [vmem:[%s1029 + $0x30] sm:$0xff]
    %v1037 = vld [vmem:[%s1029 + $0x38] sm:$0xff]
    %v1039 = vsel %vm134, %v974, 0
    %v1042 = vsel %vm134, %v975, 0
    %v1045 = vsel %vm134, %v976, 0
    %v1048 = vsel %vm134, %v977, 0
    %v1051 = vsel %vm134, %v978, 0
    %v1054 = vsel %vm134, %v979, 0
    %v1057 = vsel %vm134, %v980, 0
    %v1060 = vsel %vm134, %v981, 0
    %v1063 = vsel %vm134, %v982, 0
    %v1066 = vsel %vm134, %v983, 0
    %v1069 = vsel %vm134, %v984, 0
    %v1072 = vsel %vm134, %v985, 0
    %1074 = vmatprep.subr.mxu0 0.0
    %1075 = vmatpush1.msra.mxu0 %v1030
    %1076 = vmatprep.subr.mxu0 0.0
    %1077 = vmatpush1.msra.mxu0 %v1031
    %1078 = vmatprep.subr.mxu0 0.0
    %1079 = vmatpush1.msra.mxu0 %v1032
    %1080 = vmatprep.subr.mxu0 0.0
    %1081 = vmatpush1.msra.mxu0 %v1033
    %1082 = vmatprep.subr.mxu0 0.0
    %1083 = vmatpush1.msra.mxu0 %v1034
    %1084 = vmatprep.subr.mxu0 0.0
    %1085 = vmatpush1.msra.mxu0 %v1035
    %1086 = vmatprep.subr.mxu0 0.0
    %1087 = vmatpush1.msra.mxu0 %v1036
    %1088 = vmatprep.subr.mxu0 0.0
    %1089 = vmatpush1.msra.mxu0 %v1037
    %1090 = vmatprep.subr.mxu0 0.0
    %1091 = vmatpush1.msra.mxu0 0.0
    %1092 = vmatprep.subr.mxu0 0.0
    %1093 = vmatpush1.msra.mxu0 0.0
    %1094 = vmatprep.subr.mxu0 0.0
    %1095 = vmatpush1.msra.mxu0 0.0
    %1096 = vmatprep.subr.mxu0 0.0
    %1097 = vmatpush1.msra.mxu0 0.0
    %1098 = vmatprep.subr.mxu0 0.0
    %1099 = vmatpush1.msra.mxu0 0.0
    %1100 = vmatprep.subr.mxu0 0.0
    %1101 = vmatpush1.msra.mxu0 0.0
    %1102 = vmatprep.subr.mxu0 0.0
    %1103 = vmatpush1.msra.mxu0 0.0
    %1104 = vmatprep.subr.mxu0 0.0
    %1105 = vmatpush1.msra.mxu0 0.0
    %1106 = vmatprep.subr.mxu0 0.0
    %1107 = vmatpush1.msra.mxu0 0.0
    %1108 = vmatprep.subr.mxu0 0.0
    %1109 = vmatpush1.msra.mxu0 0.0
    %1110 = vmatprep.subr.mxu0 0.0
    %1111 = vmatpush1.msra.mxu0 0.0
    %1112 = vmatprep.subr.mxu0 0.0
    %1113 = vmatpush1.msra.mxu0 0.0
    %1114 = vmatprep.subr.mxu0 0.0
    %1115 = vmatpush1.msra.mxu0 0.0
    %1116 = vmatprep.subr.mxu0 0.0
    %1117 = vmatpush1.msra.mxu0 0.0
    %1118 = vmatprep.subr.mxu0 0.0
    %1119 = vmatpush1.msra.mxu0 0.0
    %1120 = vmatprep.subr.mxu0 0.0
    %1121 = vmatpush1.msra.mxu0 0.0
    %1122 = vmatprep.subr.mxu0 0.0
    %1123 = vmatpush1.msra.mxu0 0.0
    %1124 = vmatprep.subr.mxu0 0.0
    %1125 = vmatpush1.msra.mxu0 0.0
    %1126 = vmatprep.subr.mxu0 0.0
    %1127 = vmatpush1.msra.mxu0 0.0
    %1128 = vmatprep.subr.mxu0 0.0
    %1129 = vmatpush1.msra.mxu0 0.0
    %1130 = vmatprep.subr.mxu0 0.0
    %1131 = vmatpush1.msra.mxu0 0.0
    %1132 = vmatprep.subr.mxu0 0.0
    %1133 = vmatpush1.msra.mxu0 0.0
    %1134 = vmatprep.subr.mxu0 0.0
    %1135 = vmatpush1.msra.mxu0 0.0
    %1136 = vmatprep.subr.mxu0 0.0
    %1137 = vmatpush1.msra.mxu0 0.0
    %1138 = vmatprep.mubr.f32.mxu0 0.0
    %1139 = vmatmul.mubr.f32.gmra.mrb[0].mxu0 %v1039
    %v1140 = vpop.f32.mrb[0].mxu0
    %v1141 = vadd.f32 0.0, %v1140
    %v1142 = vpop.f32.mrb[0].mxu0
    %1143 = vmatprep.mubr.f32.mxu0 0.0
    %1144 = vmatmul.mubr.f32.gmra.mrb[0].mxu0 %v1042
    %v1145 = vpop.f32.mrb[0].mxu0
    %v1146 = vadd.f32 0.0, %v1145
    %v1147 = vpop.f32.mrb[0].mxu0
    %1148 = vmatprep.mubr.f32.mxu0 0.0
    %1149 = vmatmul.mubr.f32.gmra.mrb[0].mxu0 %v1045
    %v1150 = vpop.f32.mrb[0].mxu0
    %v1151 = vpop.f32.mrb[0].mxu0
    %1152 = vmatprep.mubr.f32.mxu0 0.0
    %1153 = vmatmul.mubr.f32.gmra.mrb[0].mxu0 %v1048
    %v1154 = vpop.f32.mrb[0].mxu0
    %v1155 = vpop.f32.mrb[0].mxu0
    %1156 = vmatprep.mubr.f32.mxu0 0.0
    %1157 = vmatmul.mubr.f32.gmra.mrb[0].mxu0 %v1051
    %v1158 = vpop.f32.mrb[0].mxu0
    %v1159 = vpop.f32.mrb[0].mxu0
    %1160 = vmatprep.mubr.f32.mxu0 0.0
    %1161 = vmatmul.mubr.f32.gmra.mrb[0].mxu0 %v1054
    %v1162 = vpop.f32.mrb[0].mxu0
    %v1163 = vpop.f32.mrb[0].mxu0
    %1164 = vmatprep.mubr.f32.mxu0 0.0
    %1165 = vmatmul.mubr.f32.gmra.mrb[0].mxu0 %v1057
    %v1166 = vpop.f32.mrb[0].mxu0
    %v1167 = vpop.f32.mrb[0].mxu0
    %1168 = vmatprep.mubr.f32.mxu0 0.0
    %1169 = vmatmul.mubr.f32.gmra.mrb[0].mxu0 %v1060
    %v1170 = vpop.f32.mrb[0].mxu0
    %v1171 = vpop.f32.mrb[0].mxu0
    %1172 = vmatprep.mubr.f32.mxu0 0.0
    %1173 = vmatmul.mubr.f32.gmra.mrb[0].mxu0 %v1063
    %v1174 = vpop.f32.mrb[0].mxu0
    %v1175 = vpop.f32.mrb[0].mxu0
    %1176 = vmatprep.mubr.f32.mxu0 0.0
    %1177 = vmatmul.mubr.f32.gmra.mrb[0].mxu0 %v1066
    %v1178 = vpop.f32.mrb[0].mxu0
    %v1179 = vpop.f32.mrb[0].mxu0
    %1180 = vmatprep.mubr.f32.mxu0 0.0
    %1181 = vmatmul.mubr.f32.gmra.mrb[0].mxu0 %v1069
    %v1182 = vpop.f32.mrb[0].mxu0
    %v1183 = vpop.f32.mrb[0].mxu0
    %1184 = vmatprep.mubr.f32.mxu0 0.0
    %1185 = vmatmul.mubr.f32.gmra.mrb[0].mxu0 %v1072
    %v1186 = vpop.f32.mrb[0].mxu0
    %v1187 = vpop.f32.mrb[0].mxu0
    %1188 = vdwg.mxu0
    %v1190 = vsel %vm134, %v1008, 0
    %v1193 = vsel %vm134, %v1009, 0
    %v1196 = vsel %vm134, %v1010, 0
    %v1199 = vsel %vm134, %v1011, 0
    %v1202 = vsel %vm134, %v1012, 0
    %v1205 = vsel %vm134, %v1013, 0
    %v1208 = vsel %vm134, %v1014, 0
    %v1211 = vsel %vm134, %v1015, 0
    %v1214 = vsel %vm134, %v1016, 0
    %v1217 = vsel %vm134, %v1017, 0
    %v1220 = vsel %vm134, %v1018, 0
    %v1223 = vsel %vm134, %v1019, 0
    %1225 = vmatprep.subr.mxu0 0.0
    %1226 = vmatpush1.msra.mxu0 %v1021
    %1227 = vmatprep.subr.mxu0 0.0
    %1228 = vmatpush1.msra.mxu0 %v1022
    %1229 = vmatprep.subr.mxu0 0.0
    %1230 = vmatpush1.msra.mxu0 %v1023
    %1231 = vmatprep.subr.mxu0 0.0
    %1232 = vmatpush1.msra.mxu0 %v1024
    %1233 = vmatprep.subr.mxu0 0.0
    %1234 = vmatpush1.msra.mxu0 %v1025
    %1235 = vmatprep.subr.mxu0 0.0
    %1236 = vmatpush1.msra.mxu0 %v1026
    %1237 = vmatprep.subr.mxu0 0.0
    %1238 = vmatpush1.msra.mxu0 %v1027
    %1239 = vmatprep.subr.mxu0 0.0
    %1240 = vmatpush1.msra.mxu0 %v1028
    %1241 = vmatprep.subr.mxu0 0.0
    %1242 = vmatpush1.msra.mxu0 0.0
    %1243 = vmatprep.subr.mxu0 0.0
    %1244 = vmatpush1.msra.mxu0 0.0
    %1245 = vmatprep.subr.mxu0 0.0
    %1246 = vmatpush1.msra.mxu0 0.0
    %1247 = vmatprep.subr.mxu0 0.0
    %1248 = vmatpush1.msra.mxu0 0.0
    %1249 = vmatprep.subr.mxu0 0.0
    %1250 = vmatpush1.msra.mxu0 0.0
    %1251 = vmatprep.subr.mxu0 0.0
    %1252 = vmatpush1.msra.mxu0 0.0
    %1253 = vmatprep.subr.mxu0 0.0
    %1254 = vmatpush1.msra.mxu0 0.0
    %1255 = vmatprep.subr.mxu0 0.0
    %1256 = vmatpush1.msra.mxu0 0.0
    %1257 = vmatprep.subr.mxu0 0.0
    %1258 = vmatpush1.msra.mxu0 0.0
    %1259 = vmatprep.subr.mxu0 0.0
    %1260 = vmatpush1.msra.mxu0 0.0
    %1261 = vmatprep.subr.mxu0 0.0
    %1262 = vmatpush1.msra.mxu0 0.0
    %1263 = vmatprep.subr.mxu0 0.0
    %1264 = vmatpush1.msra.mxu0 0.0
    %1265 = vmatprep.subr.mxu0 0.0
    %1266 = vmatpush1.msra.mxu0 0.0
    %1267 = vmatprep.subr.mxu0 0.0
    %1268 = vmatpush1.msra.mxu0 0.0
    %1269 = vmatprep.subr.mxu0 0.0
    %1270 = vmatpush1.msra.mxu0 0.0
    %1271 = vmatprep.subr.mxu0 0.0
    %1272 = vmatpush1.msra.mxu0 0.0
    %1273 = vmatprep.subr.mxu0 0.0
    %1274 = vmatpush1.msra.mxu0 0.0
    %1275 = vmatprep.subr.mxu0 0.0
    %1276 = vmatpush1.msra.mxu0 0.0
    %1277 = vmatprep.subr.mxu0 0.0
    %1278 = vmatpush1.msra.mxu0 0.0
    %1279 = vmatprep.subr.mxu0 0.0
    %1280 = vmatpush1.msra.mxu0 0.0
    %1281 = vmatprep.subr.mxu0 0.0
    %1282 = vmatpush1.msra.mxu0 0.0
    %1283 = vmatprep.subr.mxu0 0.0
    %1284 = vmatpush1.msra.mxu0 0.0
    %1285 = vmatprep.subr.mxu0 0.0
    %1286 = vmatpush1.msra.mxu0 0.0
    %1287 = vmatprep.subr.mxu0 0.0
    %1288 = vmatpush1.msra.mxu0 0.0
    %1289 = vmatprep.mubr.f32.mxu0 0.0
    %1290 = vmatmul.mubr.f32.gmra.mrb[0].mxu0 %v1190
    %v1291 = vpop.f32.mrb[0].mxu0
    %v1292 = vadd.f32 %v1141, %v1291
    %v1293 = vpop.f32.mrb[0].mxu0
    %1294 = vmatprep.mubr.f32.mxu0 0.0
    %1295 = vmatmul.mubr.f32.gmra.mrb[0].mxu0 %v1193
    %v1296 = vpop.f32.mrb[0].mxu0
    %v1297 = vadd.f32 %v1146, %v1296
    %v1298 = vpop.f32.mrb[0].mxu0
    %1299 = vmatprep.mubr.f32.mxu0 0.0
    %1300 = vmatmul.mubr.f32.gmra.mrb[0].mxu0 %v1196
    %v1301 = vpop.f32.mrb[0].mxu0
    %v1302 = vpop.f32.mrb[0].mxu0
    %1303 = vmatprep.mubr.f32.mxu0 0.0
    %1304 = vmatmul.mubr.f32.gmra.mrb[0].mxu0 %v1199
    %v1305 = vpop.f32.mrb[0].mxu0
    %v1306 = vpop.f32.mrb[0].mxu0
    %1307 = vmatprep.mubr.f32.mxu0 0.0
    %1308 = vmatmul.mubr.f32.gmra.mrb[0].mxu0 %v1202
    %v1309 = vpop.f32.mrb[0].mxu0
    %v1310 = vpop.f32.mrb[0].mxu0
    %1311 = vmatprep.mubr.f32.mxu0 0.0
    %1312 = vmatmul.mubr.f32.gmra.mrb[0].mxu0 %v1205
    %v1313 = vpop.f32.mrb[0].mxu0
    %v1314 = vpop.f32.mrb[0].mxu0
    %1315 = vmatprep.mubr.f32.mxu0 0.0
    %1316 = vmatmul.mubr.f32.gmra.mrb[0].mxu0 %v1208
    %v1317 = vpop.f32.mrb[0].mxu0
    %v1318 = vpop.f32.mrb[0].mxu0
    %1319 = vmatprep.mubr.f32.mxu0 0.0
    %1320 = vmatmul.mubr.f32.gmra.mrb[0].mxu0 %v1211
    %v1321 = vpop.f32.mrb[0].mxu0
    %v1322 = vpop.f32.mrb[0].mxu0
    %1323 = vmatprep.mubr.f32.mxu0 0.0
    %1324 = vmatmul.mubr.f32.gmra.mrb[0].mxu0 %v1214
    %v1325 = vpop.f32.mrb[0].mxu0
    %v1326 = vpop.f32.mrb[0].mxu0
    %1327 = vmatprep.mubr.f32.mxu0 0.0
    %1328 = vmatmul.mubr.f32.gmra.mrb[0].mxu0 %v1217
    %v1329 = vpop.f32.mrb[0].mxu0
    %v1330 = vpop.f32.mrb[0].mxu0
    %1331 = vmatprep.mubr.f32.mxu0 0.0
    %1332 = vmatmul.mubr.f32.gmra.mrb[0].mxu0 %v1220
    %v1333 = vpop.f32.mrb[0].mxu0
    %v1334 = vpop.f32.mrb[0].mxu0
    %1335 = vmatprep.mubr.f32.mxu0 0.0
    %1336 = vmatmul.mubr.f32.gmra.mrb[0].mxu0 %v1223
    %v1337 = vpop.f32.mrb[0].mxu0
    %v1338 = vpop.f32.mrb[0].mxu0
    %1339 = vdwg.mxu0
    %v1340 = vld [vmem:[%s2 + $0x5] sm:$0x1]
    %v1341 = vlaneseq
    %v1342 = vshrl.u32 %v1341, 7
    %v1343 = vsub.s32 0, %v1342
    %v1344 = vrot.slane %v1340, %v1343
    %v1345 = vadd.f32 %v1292, %v1344
    %v1346 = vadd.f32 %v1297, %v1344
    %v1347 = vmax.f32 %v1345, 0.0
    %v1348 = vmax.f32 %v1346, 0.0
    %s1349 = scalar_lea.vmem [#allocation3], 512
    %v1350 = vld [vmem:[%s1349] sm:$0xff]
    %v1351 = vld [vmem:[%s1349 + $0x8] sm:$0xff]
    %v1352 = vld [vmem:[%s1349 + $0x10] sm:$0xff]
    %v1353 = vld [vmem:[%s1349 + $0x18] sm:$0xff]
    %v1354 = vld [vmem:[%s1349 + $0x20] sm:$0xff]
    %v1355 = vld [vmem:[%s1349 + $0x28] sm:$0xff]
    %v1356 = vld [vmem:[%s1349 + $0x30] sm:$0xff]
    %v1357 = vld [vmem:[%s1349 + $0x38] sm:$0xff]
    %v1358 = vld [vmem:[%s2 + $0x6] sm:$0x1]
    %v1359 = vlaneseq
    %v1360 = vshrl.u32 %v1359, 7
    %v1361 = vsub.s32 0, %v1360
    %v1362 = vrot.slane %v1358, %v1361
    %v1364 = vsel %vm134, %v1347, 0
    %v1367 = vsel %vm134, %v1348, 0
    %1369 = vmatprep.subr.mxu0 0.0
    %1370 = vmatpush1.msra.mxu0 %v1350
    %1371 = vmatprep.subr.mxu0 0.0
    %1372 = vmatpush1.msra.mxu0 %v1351
    %1373 = vmatprep.subr.mxu0 0.0
    %1374 = vmatpush1.msra.mxu0 %v1352
    %1375 = vmatprep.subr.mxu0 0.0
    %1376 = vmatpush1.msra.mxu0 %v1353
    %1377 = vmatprep.subr.mxu0 0.0
    %1378 = vmatpush1.msra.mxu0 %v1354
    %1379 = vmatprep.subr.mxu0 0.0
    %1380 = vmatpush1.msra.mxu0 %v1355
    %1381 = vmatprep.subr.mxu0 0.0
    %1382 = vmatpush1.msra.mxu0 %v1356
    %1383 = vmatprep.subr.mxu0 0.0
    %1384 = vmatpush1.msra.mxu0 %v1357
    %1385 = vmatprep.subr.mxu0 0.0
    %1386 = vmatpush1.msra.mxu0 0.0
    %1387 = vmatprep.subr.mxu0 0.0
    %1388 = vmatpush1.msra.mxu0 0.0
    %1389 = vmatprep.subr.mxu0 0.0
    %1390 = vmatpush1.msra.mxu0 0.0
    %1391 = vmatprep.subr.mxu0 0.0
    %1392 = vmatpush1.msra.mxu0 0.0
    %1393 = vmatprep.subr.mxu0 0.0
    %1394 = vmatpush1.msra.mxu0 0.0
    %1395 = vmatprep.subr.mxu0 0.0
    %1396 = vmatpush1.msra.mxu0 0.0
    %1397 = vmatprep.subr.mxu0 0.0
    %1398 = vmatpush1.msra.mxu0 0.0
    %1399 = vmatprep.subr.mxu0 0.0
    %1400 = vmatpush1.msra.mxu0 0.0
    %1401 = vmatprep.subr.mxu0 0.0
    %1402 = vmatpush1.msra.mxu0 0.0
    %1403 = vmatprep.subr.mxu0 0.0
    %1404 = vmatpush1.msra.mxu0 0.0
    %1405 = vmatprep.subr.mxu0 0.0
    %1406 = vmatpush1.msra.mxu0 0.0
    %1407 = vmatprep.subr.mxu0 0.0
    %1408 = vmatpush1.msra.mxu0 0.0
    %1409 = vmatprep.subr.mxu0 0.0
    %1410 = vmatpush1.msra.mxu0 0.0
    %1411 = vmatprep.subr.mxu0 0.0
    %1412 = vmatpush1.msra.mxu0 0.0
    %1413 = vmatprep.subr.mxu0 0.0
    %1414 = vmatpush1.msra.mxu0 0.0
    %1415 = vmatprep.subr.mxu0 0.0
    %1416 = vmatpush1.msra.mxu0 0.0
    %1417 = vmatprep.subr.mxu0 0.0
    %1418 = vmatpush1.msra.mxu0 0.0
    %1419 = vmatprep.subr.mxu0 0.0
    %1420 = vmatpush1.msra.mxu0 0.0
    %1421 = vmatprep.subr.mxu0 0.0
    %1422 = vmatpush1.msra.mxu0 0.0
    %1423 = vmatprep.subr.mxu0 0.0
    %1424 = vmatpush1.msra.mxu0 0.0
    %1425 = vmatprep.subr.mxu0 0.0
    %1426 = vmatpush1.msra.mxu0 0.0
    %1427 = vmatprep.subr.mxu0 0.0
    %1428 = vmatpush1.msra.mxu0 0.0
    %1429 = vmatprep.subr.mxu0 0.0
    %1430 = vmatpush1.msra.mxu0 0.0
    %1431 = vmatprep.subr.mxu0 0.0
    %1432 = vmatpush1.msra.mxu0 0.0
    %1433 = vmatprep.mubr.f32.mxu0 0.0
    %1434 = vmatmul.mubr.f32.gmra.mrb[0].mxu0 %v1364
    %v1435 = vpop.f32.mrb[0].mxu0
    %v1436 = vadd.f32 %v1362, %v1435
    %v1437 = vpop.f32.mrb[0].mxu0
    %1438 = vmatprep.mubr.f32.mxu0 0.0
    %1439 = vmatmul.mubr.f32.gmra.mrb[0].mxu0 %v1367
    %v1440 = vpop.f32.mrb[0].mxu0
    %v1441 = vadd.f32 %v1362, %v1440
    %v1442 = vpop.f32.mrb[0].mxu0
    %1443 = vdwg.mxu0
    %v1444 = vmax.f32 %v1436, 0.0
    %v1445 = vmax.f32 %v1441, 0.0
    %s1446 = scalar_lea.vmem [#allocation3], 576
    %v1447 = vld [vmem:[%s1446] sm:$0xff]
    %v1448 = vld [vmem:[%s1446 + $0x8] sm:$0xff]
    %v1449 = vld [vmem:[%s1446 + $0x10] sm:$0xff]
    %v1450 = vld [vmem:[%s1446 + $0x18] sm:$0xff]
    %v1451 = vld [vmem:[%s1446 + $0x20] sm:$0xff]
    %v1452 = vld [vmem:[%s1446 + $0x28] sm:$0xff]
    %v1453 = vld [vmem:[%s1446 + $0x30] sm:$0xff]
    %v1454 = vld [vmem:[%s1446 + $0x38] sm:$0xff]
    %v1455 = vld [vmem:[%s2 + $0x7] sm:$0x1]
    %v1456 = vlaneseq
    %v1457 = vshrl.u32 %v1456, 7
    %v1458 = vsub.s32 0, %v1457
    %v1459 = vrot.slane %v1455, %v1458
    %v1461 = vsel %vm134, %v1444, 0
    %v1464 = vsel %vm134, %v1445, 0
    %1466 = vmatprep.subr.mxu0 0.0
    %1467 = vmatpush1.msra.mxu0 %v1447
    %1468 = vmatprep.subr.mxu0 0.0
    %1469 = vmatpush1.msra.mxu0 %v1448
    %1470 = vmatprep.subr.mxu0 0.0
    %1471 = vmatpush1.msra.mxu0 %v1449
    %1472 = vmatprep.subr.mxu0 0.0
    %1473 = vmatpush1.msra.mxu0 %v1450
    %1474 = vmatprep.subr.mxu0 0.0
    %1475 = vmatpush1.msra.mxu0 %v1451
    %1476 = vmatprep.subr.mxu0 0.0
    %1477 = vmatpush1.msra.mxu0 %v1452
    %1478 = vmatprep.subr.mxu0 0.0
    %1479 = vmatpush1.msra.mxu0 %v1453
    %1480 = vmatprep.subr.mxu0 0.0
    %1481 = vmatpush1.msra.mxu0 %v1454
    %1482 = vmatprep.subr.mxu0 0.0
    %1483 = vmatpush1.msra.mxu0 0.0
    %1484 = vmatprep.subr.mxu0 0.0
    %1485 = vmatpush1.msra.mxu0 0.0
    %1486 = vmatprep.subr.mxu0 0.0
    %1487 = vmatpush1.msra.mxu0 0.0
    %1488 = vmatprep.subr.mxu0 0.0
    %1489 = vmatpush1.msra.mxu0 0.0
    %1490 = vmatprep.subr.mxu0 0.0
    %1491 = vmatpush1.msra.mxu0 0.0
    %1492 = vmatprep.subr.mxu0 0.0
    %1493 = vmatpush1.msra.mxu0 0.0
    %1494 = vmatprep.subr.mxu0 0.0
    %1495 = vmatpush1.msra.mxu0 0.0
    %1496 = vmatprep.subr.mxu0 0.0
    %1497 = vmatpush1.msra.mxu0 0.0
    %1498 = vmatprep.subr.mxu0 0.0
    %1499 = vmatpush1.msra.mxu0 0.0
    %1500 = vmatprep.subr.mxu0 0.0
    %1501 = vmatpush1.msra.mxu0 0.0
    %1502 = vmatprep.subr.mxu0 0.0
    %1503 = vmatpush1.msra.mxu0 0.0
    %1504 = vmatprep.subr.mxu0 0.0
    %1505 = vmatpush1.msra.mxu0 0.0
    %1506 = vmatprep.subr.mxu0 0.0
    %1507 = vmatpush1.msra.mxu0 0.0
    %1508 = vmatprep.subr.mxu0 0.0
    %1509 = vmatpush1.msra.mxu0 0.0
    %1510 = vmatprep.subr.mxu0 0.0
    %1511 = vmatpush1.msra.mxu0 0.0
    %1512 = vmatprep.subr.mxu0 0.0
    %1513 = vmatpush1.msra.mxu0 0.0
    %1514 = vmatprep.subr.mxu0 0.0
    %1515 = vmatpush1.msra.mxu0 0.0
    %1516 = vmatprep.subr.mxu0 0.0
    %1517 = vmatpush1.msra.mxu0 0.0
    %1518 = vmatprep.subr.mxu0 0.0
    %1519 = vmatpush1.msra.mxu0 0.0
    %1520 = vmatprep.subr.mxu0 0.0
    %1521 = vmatpush1.msra.mxu0 0.0
    %1522 = vmatprep.subr.mxu0 0.0
    %1523 = vmatpush1.msra.mxu0 0.0
    %1524 = vmatprep.subr.mxu0 0.0
    %1525 = vmatpush1.msra.mxu0 0.0
    %1526 = vmatprep.subr.mxu0 0.0
    %1527 = vmatpush1.msra.mxu0 0.0
    %1528 = vmatprep.subr.mxu0 0.0
    %1529 = vmatpush1.msra.mxu0 0.0
    %1530 = vmatprep.mubr.f32.mxu0 0.0
    %1531 = vmatmul.mubr.f32.gmra.mrb[0].mxu0 %v1461
    %v1532 = vpop.f32.mrb[0].mxu0
    %v1533 = vadd.f32 %v1459, %v1532
    %v1534 = vpop.f32.mrb[0].mxu0
    %1535 = vmatprep.mubr.f32.mxu0 0.0
    %1536 = vmatmul.mubr.f32.gmra.mrb[0].mxu0 %v1464
    %v1537 = vpop.f32.mrb[0].mxu0
    %v1538 = vadd.f32 %v1459, %v1537
    %v1539 = vpop.f32.mrb[0].mxu0
    %1540 = vdwg.mxu0
    %1541 = vst.msk [vmem:[%s3] sm:$0xff] %vm134, %v1533
    %1542 = vst.msk [vmem:[%s3 + $0x8] sm:$0xff] %vm134, %v1538
    // Predicated region
    $region18: #{value_network_forward.1} parent=1 // pred_check
      _
    $region19: #{value_network_forward.1} parent=1 // pred_check_branch
      %1544 = sbr.rel (0) target = $region21
    $region20: #{value_network_forward.1} parent=1 // pred_region
      _
    $region21: #{value_network_forward.1} parent=1 // pred_fallthru
      _
    // Predicated region
    $region22: #{value_network_forward.1} parent=1 // pred_check
      _
    $region23: #{value_network_forward.1} parent=1 // pred_check_branch
      %1546 = sbr.rel (0) target = $region25
    $region24: #{value_network_forward.1} parent=1 // pred_region
      _
    $region25: #{value_network_forward.1} parent=1 // pred_fallthru
      _
    %1547 = vsyncpa [#allocation4], 1

</llo_original>
